<compile_context>
chip_gen: v7x
topology: tpu7x:2x2x1
jax: 0.10.0
libtpu: 0.0.40
codegen_flags: <defaults>
</compile_context>

<pallas_src>
import functools

import jax
import jax.numpy as jnp
from jax.experimental import pallas as pl
from jax.experimental.pallas import tpu as pltpu


def _round_up(x, m):
    return ((x + m - 1) // m) * m


def _fused_kernel(stu_ref, tea_ref, posm_ref, negm_ref,
                  wrow_ref, wcol_ref, hrow_ref, hcol_ref,
                  out_ref,
                  wstack_scr, h_scr,
                  *, alpha, beta, base, num_valid, tile, n_pad):
    t = pl.program_id(0)
    n = h_scr.shape[-1]

    # ----- step 0: all O(N*D + N^2) work; results persist in VMEM scratch -----
    @pl.when(t == 0)
    def _init():
        def l2_normalize(x):
            ss = jnp.sum(x * x, axis=1, keepdims=True)
            # F.normalize: x / max(||x||, 1e-12)  ==  x * rsqrt(max(ss, 1e-24))
            return x * jax.lax.rsqrt(jnp.maximum(ss, 1e-24))

        def gram(x):
            return jax.lax.dot_general(
                x, x, (((1,), (1,)), ((), ())),
                preferred_element_type=jnp.float32)

        s_n = l2_normalize(stu_ref[...].astype(jnp.float32))
        t_n = l2_normalize(tea_ref[...].astype(jnp.float32))
        S = gram(s_n)
        T = gram(t_n)

        # smooth_l1 (Huber, beta=1) for every relation, computed once
        d = S - T
        ad = jnp.abs(d)
        h_scr[...] = jnp.where(ad < 1.0, 0.5 * d * d, ad - 0.5)

        # factored multi-similarity weights
        e_na = jnp.exp(-alpha * S)                                    # exp(-a*S)
        epos = jnp.sum(e_na * posm_ref[...], axis=1, keepdims=True)   # (N,1)
        w_pos = e_na * (1.0 / (jnp.exp(-alpha * base) + epos))

        e_b = jnp.exp(beta * (S - base))                              # exp(b*(S-base))
        eneg = jnp.sum(e_b * negm_ref[...], axis=1, keepdims=True)
        w_neg = e_b * (1.0 / (1.0 + eneg))

        # stacked [W_pos ; W_neg] so the per-tile weight gather is one matmul.
        if n_pad != n:
            # padding rows are touched by the gather matmul (times a zero
            # one-hot column) so they must not hold NaN garbage.
            wstack_scr[...] = jnp.zeros_like(wstack_scr)
        wstack_scr[pl.ds(0, n), :] = w_pos
        wstack_scr[pl.ds(n_pad, n), :] = w_neg

        out_ref[...] = jnp.zeros_like(out_ref)

    # ----- every step: gather a tile of pairs and accumulate the loss -----
    iota_2n = jax.lax.broadcasted_iota(jnp.int32, (tile, 2 * n_pad), 1)
    iota_n = jax.lax.broadcasted_iota(jnp.int32, (tile, n), 1)
    row_w = (wrow_ref[...] == iota_2n).astype(jnp.float32)  # (tile, 2*Np) one-hots
    col_w = (wcol_ref[...] == iota_n).astype(jnp.float32)   # (tile, N)
    row_h = (hrow_ref[...] == iota_n).astype(jnp.float32)
    col_h = (hcol_ref[...] == iota_n).astype(jnp.float32)

    def mm(a, b):
        return jax.lax.dot_general(a, b, (((1,), (0,)), ((), ())),
                                   preferred_element_type=jnp.float32)

    # weights in miner pair-list order, huber in row-major order (module quirk)
    w_g = jnp.sum(mm(row_w, wstack_scr[...]) * col_w, axis=1, keepdims=True)
    h_g = jnp.sum(mm(row_h, h_scr[...]) * col_h, axis=1, keepdims=True)

    k = t * tile + jax.lax.broadcasted_iota(jnp.int32, (tile, 1), 0)
    valid = (k < num_valid).astype(jnp.float32)        # mask the padding slots
    out_ref[...] += jnp.sum(h_g * w_g * valid).reshape(1, 1)

    @pl.when(t == pl.num_programs(0) - 1)
    def _finalize():
        out_ref[...] = out_ref[...] * (1.0 / float(num_valid))


def multi_similarity_weighted_rkd_huber(student, teacher, miner_outputs,
                                        alpha=1.0, beta=50.0, base=0.0,
                                        pair_tile=512):
    a1, p, a2, n = (jnp.asarray(x).astype(jnp.int32) for x in miner_outputs)
    N, D = student.shape
    n_pad = _round_up(N, 8)                 # aligned row offset for the W stack
    P = int(a1.shape[0])
    Q = int(a2.shape[0])
    K = P + Q
    nt = max(1, -(-K // pair_tile))
    padK = nt * pair_tile

    # pair masks (module semantics: get_masks) -- XLA glue
    posm = jnp.zeros((N, N), jnp.float32).at[a1, p].set(1.0)
    negm = jnp.zeros((N, N), jnp.float32).at[a2, n].set(1.0)

    # torch boolean-mask indexing (S[pos_mask]) yields entries in row-major order
    op = jnp.argsort(a1 * N + p)
    on = jnp.argsort(a2 * N + n)

    def pack(parts):
        x = jnp.concatenate(parts)
        return jnp.pad(x, (0, padK - K)).reshape(padK, 1).astype(jnp.int32)

    wrow = pack([a1, n_pad + a2])            # weight gather: pair-list order;
    wcol = pack([p, n])                      #   neg rows offset into W_neg half
    hrow = pack([a1[op], a2[on]])            # huber gather: row-major order
    hcol = pack([p[op], n[on]])

    kernel = functools.partial(
        _fused_kernel, alpha=float(alpha), beta=float(beta), base=float(base),
        num_valid=K, tile=pair_tile, n_pad=n_pad)

    nn_spec = pl.BlockSpec((N, N), lambda t: (0, 0))
    nd_spec = pl.BlockSpec((N, D), lambda t: (0, 0))
    idx_spec = pl.BlockSpec((pair_tile, 1), lambda t: (t, 0))

    cost = pl.CostEstimate(
        flops=int(4 * N * N * D + 8 * padK * N * N + 24 * N * N),
        transcendentals=int(2 * N * N),
        bytes_accessed=int(4 * (2 * N * D + 2 * N * N + 4 * padK + 1)))

    loss = pl.pallas_call(
        kernel,
        grid=(nt,),
        in_specs=[nd_spec, nd_spec, nn_spec, nn_spec,
                  idx_spec, idx_spec, idx_spec, idx_spec],
        out_specs=pl.BlockSpec((1, 1), lambda t: (0, 0)),
        out_shape=jax.ShapeDtypeStruct((1, 1), jnp.float32),
        scratch_shapes=[pltpu.VMEM((2 * n_pad, N), jnp.float32),  # [W_pos; W_neg]
                        pltpu.VMEM((N, N), jnp.float32)],         # Huber(S, T)
        compiler_params=pltpu.CompilerParams(
            dimension_semantics=("arbitrary",)),
        cost_estimate=cost,
    )(student, teacher, posm, negm, wrow, wcol, hrow, hcol)
    return loss[0, 0]


def _ref_loss(student, teacher, miner_outputs, alpha=1.0, beta=50.0, base=0.0):
    """Pure-JAX reference mirroring the PyTorch module semantics exactly."""
    a1, p, a2, n = miner_outputs
    N = student.shape[0]
    norm = lambda x: x / jnp.maximum(
        jnp.sqrt(jnp.sum(x * x, axis=1, keepdims=True)), 1e-12)
    sn, tn = norm(student), norm(teacher)
    S = sn @ sn.T
    T = tn @ tn.T
    pos_mask = jnp.zeros((N, N), jnp.float32).at[a1, p].set(1.0)
    neg_mask = jnp.zeros((N, N), jnp.float32).at[a2, n].set(1.0)
    term1 = jnp.exp(-alpha * (base - S[a1, p]))
    term2 = jnp.exp(-alpha * (S[a1] - S[a1, p][:, None])) * pos_mask[a1]
    pos_w = 1.0 / (term1 + term2.sum(1))
    numer = jnp.exp(beta * (S[a2, n] - base))
    denom = jnp.exp(beta * (S[a2] - base)) * neg_mask[a2]
    neg_w = numer / (1.0 + denom.sum(1))
    weights = jnp.concatenate([pos_w, neg_w])
    op = jnp.argsort(a1 * N + p)
    on = jnp.argsort(a2 * N + n)
    s_rel = jnp.concatenate([S[a1[op], p[op]], S[a2[on], n[on]]])
    t_rel = jnp.concatenate([T[a1[op], p[op]], T[a2[on], n[on]]])
    d = s_rel - t_rel
    ad = jnp.abs(d)
    huber = jnp.where(ad < 1.0, 0.5 * d * d, ad - 0.5)
    return jnp.mean(huber * weights)


if __name__ == "__main__":
    key = jax.random.PRNGKey(0)
    k1, k2 = jax.random.split(key)
    N, D = 16, 64
    student = jax.random.normal(k1, (N, D), jnp.float32)
    teacher = jax.random.normal(k2, (N, D), jnp.float32)

    # synthetic miner outputs: 4 classes x 4 samples, all pos / all neg pairs,
    # shuffled so pair-list order != row-major order (exercises the module's
    # weight-vs-relation ordering semantics).
    labels = jnp.repeat(jnp.arange(4), 4)
    same = labels[:, None] == labels[None, :]
    ii, jj = jnp.meshgrid(jnp.arange(N), jnp.arange(N), indexing="ij")
    pos_i, pos_j = jnp.where(same & (ii != jj))
    neg_i, neg_j = jnp.where(~same)
    perm_p = jax.random.permutation(jax.random.PRNGKey(1), pos_i.shape[0])
    perm_n = jax.random.permutation(jax.random.PRNGKey(2), neg_i.shape[0])
    miner_outputs = (pos_i[perm_p], pos_j[perm_p], neg_i[perm_n], neg_j[perm_n])

    loss = multi_similarity_weighted_rkd_huber(student, teacher, miner_outputs,
                                               pair_tile=128)
    loss = jax.block_until_ready(loss)

    ref = _ref_loss(student, teacher, miner_outputs)
    assert jnp.isfinite(loss), loss
    assert jnp.allclose(loss, ref, rtol=1e-3, atol=1e-6), (loss, ref)
    print("KERNEL_OK")
</pallas_src>

<mosaic_0001>
module attributes {stable_mosaic.version = 11 : i64} {
  func.func @_fused_kernel(%arg0: i32, %arg1: memref<16x64xf32, #tpu.memory_space<vmem>>, %arg2: memref<16x64xf32, #tpu.memory_space<vmem>>, %arg3: memref<16x16xf32, #tpu.memory_space<vmem>>, %arg4: memref<16x16xf32, #tpu.memory_space<vmem>>, %arg5: memref<128x1xi32, #tpu.memory_space<vmem>>, %arg6: memref<128x1xi32, #tpu.memory_space<vmem>>, %arg7: memref<128x1xi32, #tpu.memory_space<vmem>>, %arg8: memref<128x1xi32, #tpu.memory_space<vmem>>, %arg9: memref<1x1xf32, #tpu.memory_space<vmem>>, %arg10: memref<32x16xf32, #tpu.memory_space<vmem>>, %arg11: memref<16x16xf32, #tpu.memory_space<vmem>>) attributes {dimension_semantics = [#tpu.dimension_semantics<arbitrary>], iteration_bounds = array<i64: 2>, scalar_prefetch = 0 : i64, scratch_operands = 2 : i64, tpu.core_type = #tpu.core_type<tc>, window_params = [{pipeline_mode = #tpu.pipeline_mode<synchronous>, transform_indices = @transform_0, window_bounds = array<i64: 16, 64>}, {pipeline_mode = #tpu.pipeline_mode<synchronous>, transform_indices = @transform_1, window_bounds = array<i64: 16, 64>}, {pipeline_mode = #tpu.pipeline_mode<synchronous>, transform_indices = @transform_2, window_bounds = array<i64: 16, 16>}, {pipeline_mode = #tpu.pipeline_mode<synchronous>, transform_indices = @transform_3, window_bounds = array<i64: 16, 16>}, {transform_indices = @transform_4, window_bounds = array<i64: 128, 1>}, {transform_indices = @transform_5, window_bounds = array<i64: 128, 1>}, {transform_indices = @transform_6, window_bounds = array<i64: 128, 1>}, {transform_indices = @transform_7, window_bounds = array<i64: 128, 1>}, {pipeline_mode = #tpu.pipeline_mode<synchronous>, transform_indices = @transform_8, window_bounds = array<i64: 1, 1>}]} {
    %c0_i32 = arith.constant 0 : i32
    %0 = arith.cmpi eq, %arg0, %c0_i32 : i32
    %1 = arith.extui %0 : i1 to i32
    %c0_i32_0 = arith.constant 0 : i32
    %2 = arith.cmpi ne, %1, %c0_i32_0 : i32
    scf.if %2 {
      %c0_21 = arith.constant 0 : index
      %c0_22 = arith.constant 0 : index
      %56 = vector.load %arg1[%c0_21, %c0_22] : memref<16x64xf32, #tpu.memory_space<vmem>>, vector<16x64xf32>
      %57 = arith.mulf %56, %56 : vector<16x64xf32>
      %cst_23 = arith.constant dense<0.000000e+00> : vector<16xf32>
      %58 = vector.multi_reduction <add>, %57, %cst_23 [1] : vector<16x64xf32> to vector<16xf32>
      %59 = vector.shape_cast %58 : vector<16xf32> to vector<16x1xf32>
      %cst_24 = arith.constant 1.000000e-24 : f32
      %60 = vector.broadcast %cst_24 : f32 to vector<16x1xf32>
      %61 = arith.maximumf %59, %60 : vector<16x1xf32>
      %62 = math.rsqrt %61 : vector<16x1xf32>
      %63 = vector.broadcast %62 : vector<16x1xf32> to vector<16x64xf32>
      %64 = arith.mulf %56, %63 : vector<16x64xf32>
      %c0_25 = arith.constant 0 : index
      %c0_26 = arith.constant 0 : index
      %65 = vector.load %arg2[%c0_25, %c0_26] : memref<16x64xf32, #tpu.memory_space<vmem>>, vector<16x64xf32>
      %66 = arith.mulf %65, %65 : vector<16x64xf32>
      %cst_27 = arith.constant dense<0.000000e+00> : vector<16xf32>
      %67 = vector.multi_reduction <add>, %66, %cst_27 [1] : vector<16x64xf32> to vector<16xf32>
      %68 = vector.shape_cast %67 : vector<16xf32> to vector<16x1xf32>
      %cst_28 = arith.constant 1.000000e-24 : f32
      %69 = vector.broadcast %cst_28 : f32 to vector<16x1xf32>
      %70 = arith.maximumf %68, %69 : vector<16x1xf32>
      %71 = math.rsqrt %70 : vector<16x1xf32>
      %72 = vector.broadcast %71 : vector<16x1xf32> to vector<16x64xf32>
      %73 = arith.mulf %65, %72 : vector<16x64xf32>
      %cst_29 = arith.constant dense<0.000000e+00> : vector<16x16xf32>
      %74 = tpu.matmul %64, %64, %cst_29 {dimension_numbers = #tpu.dot_dimension_numbers<[1], [1], [0], [0], [0, 0, 1, 0], [], []>} : vector<16x64xf32>, vector<16x64xf32>, vector<16x16xf32> -> vector<16x16xf32>
      %cst_30 = arith.constant dense<0.000000e+00> : vector<16x16xf32>
      %75 = tpu.matmul %73, %73, %cst_30 {dimension_numbers = #tpu.dot_dimension_numbers<[1], [1], [0], [0], [0, 0, 1, 0], [], []>} : vector<16x64xf32>, vector<16x64xf32>, vector<16x16xf32> -> vector<16x16xf32>
      %76 = arith.subf %74, %75 : vector<16x16xf32>
      %77 = math.absf %76 : vector<16x16xf32>
      %cst_31 = arith.constant 1.000000e+00 : f32
      %78 = vector.broadcast %cst_31 : f32 to vector<16x16xf32>
      %79 = arith.cmpf olt, %77, %78 : vector<16x16xf32>
      %cst_32 = arith.constant 5.000000e-01 : f32
      %80 = vector.broadcast %cst_32 : f32 to vector<16x16xf32>
      %81 = arith.mulf %80, %76 : vector<16x16xf32>
      %82 = arith.mulf %81, %76 : vector<16x16xf32>
      %cst_33 = arith.constant 5.000000e-01 : f32
      %83 = vector.broadcast %cst_33 : f32 to vector<16x16xf32>
      %84 = arith.subf %77, %83 : vector<16x16xf32>
      %85 = arith.select %79, %82, %84 : vector<16x16xi1>, vector<16x16xf32>
      %c0_34 = arith.constant 0 : index
      %c0_35 = arith.constant 0 : index
      %86 = vector.load %arg11[%c0_34, %c0_35] : memref<16x16xf32, #tpu.memory_space<vmem>>, vector<16x16xf32>
      tpu.vector_store %arg11[%c0_34, %c0_35], %85 {strides = array<i32>} : memref<16x16xf32, #tpu.memory_space<vmem>>, vector<16x16xf32>,
      %cst_36 = arith.constant -1.000000e+00 : f32
      %87 = vector.broadcast %cst_36 : f32 to vector<16x16xf32>
      %88 = arith.mulf %87, %74 : vector<16x16xf32>
      %89 = math.exp %88 : vector<16x16xf32>
      %c0_37 = arith.constant 0 : index
      %c0_38 = arith.constant 0 : index
      %90 = vector.load %arg3[%c0_37, %c0_38] : memref<16x16xf32, #tpu.memory_space<vmem>>, vector<16x16xf32>
      %91 = arith.mulf %89, %90 : vector<16x16xf32>
      %cst_39 = arith.constant dense<0.000000e+00> : vector<16xf32>
      %92 = vector.multi_reduction <add>, %91, %cst_39 [1] : vector<16x16xf32> to vector<16xf32>
      %93 = vector.shape_cast %92 : vector<16xf32> to vector<16x1xf32>
      %cst_40 = arith.constant -0.000000e+00 : f32
      %94 = math.exp %cst_40 : f32
      %95 = vector.broadcast %94 : f32 to vector<16x1xf32>
      %96 = arith.addf %95, %93 : vector<16x1xf32>
      %cst_41 = arith.constant 1.000000e+00 : f32
      %97 = vector.broadcast %cst_41 : f32 to vector<16x1xf32>
      %98 = arith.divf %97, %96 : vector<16x1xf32>
      %99 = vector.broadcast %98 : vector<16x1xf32> to vector<16x16xf32>
      %100 = arith.mulf %89, %99 : vector<16x16xf32>
      %cst_42 = arith.constant 0.000000e+00 : f32
      %101 = vector.broadcast %cst_42 : f32 to vector<16x16xf32>
      %102 = arith.subf %74, %101 : vector<16x16xf32>
      %cst_43 = arith.constant 5.000000e+01 : f32
      %103 = vector.broadcast %cst_43 : f32 to vector<16x16xf32>
      %104 = arith.mulf %103, %102 : vector<16x16xf32>
      %105 = math.exp %104 : vector<16x16xf32>
      %c0_44 = arith.constant 0 : index
      %c0_45 = arith.constant 0 : index
      %106 = vector.load %arg4[%c0_44, %c0_45] : memref<16x16xf32, #tpu.memory_space<vmem>>, vector<16x16xf32>
      %107 = arith.mulf %105, %106 : vector<16x16xf32>
      %cst_46 = arith.constant dense<0.000000e+00> : vector<16xf32>
      %108 = vector.multi_reduction <add>, %107, %cst_46 [1] : vector<16x16xf32> to vector<16xf32>
      %109 = vector.shape_cast %108 : vector<16xf32> to vector<16x1xf32>
      %cst_47 = arith.constant 1.000000e+00 : f32
      %110 = vector.broadcast %cst_47 : f32 to vector<16x1xf32>
      %111 = arith.addf %110, %109 : vector<16x1xf32>
      %cst_48 = arith.constant 1.000000e+00 : f32
      %112 = vector.broadcast %cst_48 : f32 to vector<16x1xf32>
      %113 = arith.divf %112, %111 : vector<16x1xf32>
      %114 = vector.broadcast %113 : vector<16x1xf32> to vector<16x16xf32>
      %115 = arith.mulf %105, %114 : vector<16x16xf32>
      %c0_49 = arith.constant 0 : index
      %c0_50 = arith.constant 0 : index
      %116 = vector.load %arg10[%c0_49, %c0_50] : memref<32x16xf32, #tpu.memory_space<vmem>>, vector<16x16xf32>
      tpu.vector_store %arg10[%c0_49, %c0_50], %100 {strides = array<i32>} : memref<32x16xf32, #tpu.memory_space<vmem>>, vector<16x16xf32>,
      %c16 = arith.constant 16 : index
      %c0_51 = arith.constant 0 : index
      %117 = vector.load %arg10[%c16, %c0_51] : memref<32x16xf32, #tpu.memory_space<vmem>>, vector<16x16xf32>
      tpu.vector_store %arg10[%c16, %c0_51], %115 {strides = array<i32>} : memref<32x16xf32, #tpu.memory_space<vmem>>, vector<16x16xf32>,
      %cst_52 = arith.constant 0.000000e+00 : f32
      %118 = vector.broadcast %cst_52 : f32 to vector<1x1xf32>
      %c0_53 = arith.constant 0 : index
      %c0_54 = arith.constant 0 : index
      %119 = vector.load %arg9[%c0_53, %c0_54] : memref<1x1xf32, #tpu.memory_space<vmem>>, vector<1x1xf32>
      tpu.vector_store %arg9[%c0_53, %c0_54], %118 {strides = array<i32>} : memref<1x1xf32, #tpu.memory_space<vmem>>, vector<1x1xf32>,
    } else {
    }
    %3 = tpu.iota {dimensions = array<i32: 1>} : vector<128x32xi32>
    %4 = tpu.iota {dimensions = array<i32: 1>} : vector<128x16xi32>
    %c0 = arith.constant 0 : index
    %c0_1 = arith.constant 0 : index
    %5 = vector.load %arg5[%c0, %c0_1] : memref<128x1xi32, #tpu.memory_space<vmem>>, vector<128x1xi32>
    %6 = vector.broadcast %5 : vector<128x1xi32> to vector<128x32xi32>
    %7 = arith.cmpi eq, %6, %3 : vector<128x32xi32>
    %8 = arith.extui %7 : vector<128x32xi1> to vector<128x32xi32>
    %9 = arith.sitofp %8 : vector<128x32xi32> to vector<128x32xf32>
    %c0_2 = arith.constant 0 : index
    %c0_3 = arith.constant 0 : index
    %10 = vector.load %arg6[%c0_2, %c0_3] : memref<128x1xi32, #tpu.memory_space<vmem>>, vector<128x1xi32>
    %11 = vector.broadcast %10 : vector<128x1xi32> to vector<128x16xi32>
    %12 = arith.cmpi eq, %11, %4 : vector<128x16xi32>
    %13 = arith.extui %12 : vector<128x16xi1> to vector<128x16xi32>
    %14 = arith.sitofp %13 : vector<128x16xi32> to vector<128x16xf32>
    %c0_4 = arith.constant 0 : index
    %c0_5 = arith.constant 0 : index
    %15 = vector.load %arg7[%c0_4, %c0_5] : memref<128x1xi32, #tpu.memory_space<vmem>>, vector<128x1xi32>
    %16 = vector.broadcast %15 : vector<128x1xi32> to vector<128x16xi32>
    %17 = arith.cmpi eq, %16, %4 : vector<128x16xi32>
    %18 = arith.extui %17 : vector<128x16xi1> to vector<128x16xi32>
    %19 = arith.sitofp %18 : vector<128x16xi32> to vector<128x16xf32>
    %c0_6 = arith.constant 0 : index
    %c0_7 = arith.constant 0 : index
    %20 = vector.load %arg8[%c0_6, %c0_7] : memref<128x1xi32, #tpu.memory_space<vmem>>, vector<128x1xi32>
    %21 = vector.broadcast %20 : vector<128x1xi32> to vector<128x16xi32>
    %22 = arith.cmpi eq, %21, %4 : vector<128x16xi32>
    %23 = arith.extui %22 : vector<128x16xi1> to vector<128x16xi32>
    %24 = arith.sitofp %23 : vector<128x16xi32> to vector<128x16xf32>
    %c0_8 = arith.constant 0 : index
    %c0_9 = arith.constant 0 : index
    %25 = vector.load %arg10[%c0_8, %c0_9] : memref<32x16xf32, #tpu.memory_space<vmem>>, vector<32x16xf32>
    %cst = arith.constant dense<0.000000e+00> : vector<128x16xf32>
    %26 = tpu.matmul %9, %25, %cst {dimension_numbers = #tpu.dot_dimension_numbers<[1], [0], [0], [1], [0, 0, 1, 1], [], []>} : vector<128x32xf32>, vector<32x16xf32>, vector<128x16xf32> -> vector<128x16xf32>
    %27 = arith.mulf %26, %14 : vector<128x16xf32>
    %cst_10 = arith.constant dense<0.000000e+00> : vector<128xf32>
    %28 = vector.multi_reduction <add>, %27, %cst_10 [1] : vector<128x16xf32> to vector<128xf32>
    %29 = vector.shape_cast %28 : vector<128xf32> to vector<128x1xf32>
    %c0_11 = arith.constant 0 : index
    %c0_12 = arith.constant 0 : index
    %30 = vector.load %arg11[%c0_11, %c0_12] : memref<16x16xf32, #tpu.memory_space<vmem>>, vector<16x16xf32>
    %cst_13 = arith.constant dense<0.000000e+00> : vector<128x16xf32>
    %31 = tpu.matmul %19, %30, %cst_13 {dimension_numbers = #tpu.dot_dimension_numbers<[1], [0], [0], [1], [0, 0, 1, 1], [], []>} : vector<128x16xf32>, vector<16x16xf32>, vector<128x16xf32> -> vector<128x16xf32>
    %32 = arith.mulf %31, %24 : vector<128x16xf32>
    %cst_14 = arith.constant dense<0.000000e+00> : vector<128xf32>
    %33 = vector.multi_reduction <add>, %32, %cst_14 [1] : vector<128x16xf32> to vector<128xf32>
    %34 = vector.shape_cast %33 : vector<128xf32> to vector<128x1xf32>
    %c128_i32 = arith.constant 128 : i32
    %35 = arith.muli %arg0, %c128_i32 : i32
    %36 = tpu.iota {dimensions = array<i32: 0>} : vector<128x1xi32>
    %37 = vector.broadcast %35 : i32 to vector<128x1xi32>
    %38 = arith.addi %37, %36 : vector<128x1xi32>
    %c240_i32 = arith.constant 240 : i32
    %39 = vector.broadcast %c240_i32 : i32 to vector<128x1xi32>
    %40 = arith.cmpi slt, %38, %39 : vector<128x1xi32>
    %41 = arith.extui %40 : vector<128x1xi1> to vector<128x1xi32>
    %42 = arith.sitofp %41 : vector<128x1xi32> to vector<128x1xf32>
    %c0_15 = arith.constant 0 : index
    %c0_16 = arith.constant 0 : index
    %43 = vector.load %arg9[%c0_15, %c0_16] : memref<1x1xf32, #tpu.memory_space<vmem>>, vector<1x1xf32>
    %44 = arith.mulf %34, %29 : vector<128x1xf32>
    %45 = arith.mulf %44, %42 : vector<128x1xf32>
    %46 = vector.shape_cast %45 : vector<128x1xf32> to vector<1x128x1xf32>
    %cst_17 = arith.constant dense<0.000000e+00> : vector<1xf32>
    %47 = vector.multi_reduction <add>, %46, %cst_17 [1, 2] : vector<1x128x1xf32> to vector<1xf32>
    %48 = vector.shape_cast %47 : vector<1xf32> to vector<1x1x1xf32>
    %49 = vector.extract %48[0, 0, 0] : f32 from vector<1x1x1xf32>
    %50 = vector.broadcast %49 : f32 to vector<1x1xf32>
    %51 = arith.addf %43, %50 : vector<1x1xf32>
    %c0_18 = arith.constant 0 : index
    %c0_19 = arith.constant 0 : index
    %52 = vector.load %arg9[%c0_18, %c0_19] : memref<1x1xf32, #tpu.memory_space<vmem>>, vector<1x1xf32>
    tpu.vector_store %arg9[%c0_18, %c0_19], %51 {strides = array<i32>} : memref<1x1xf32, #tpu.memory_space<vmem>>, vector<1x1xf32>,
    %c1_i32 = arith.constant 1 : i32
    %53 = arith.cmpi eq, %arg0, %c1_i32 : i32
    %54 = arith.extui %53 : i1 to i32
    %c0_i32_20 = arith.constant 0 : i32
    %55 = arith.cmpi ne, %54, %c0_i32_20 : i32
    scf.if %55 {
      %c0_21 = arith.constant 0 : index
      %c0_22 = arith.constant 0 : index
      %56 = vector.load %arg9[%c0_21, %c0_22] : memref<1x1xf32, #tpu.memory_space<vmem>>, vector<1x1xf32>
      %cst_23 = arith.constant 0.00416666688 : f32
      %57 = vector.broadcast %cst_23 : f32 to vector<1x1xf32>
      %58 = arith.mulf %56, %57 : vector<1x1xf32>
      %c0_24 = arith.constant 0 : index
      %c0_25 = arith.constant 0 : index
      %59 = vector.load %arg9[%c0_24, %c0_25] : memref<1x1xf32, #tpu.memory_space<vmem>>, vector<1x1xf32>
      tpu.vector_store %arg9[%c0_24, %c0_25], %58 {strides = array<i32>} : memref<1x1xf32, #tpu.memory_space<vmem>>, vector<1x1xf32>,
    } else {
    }
    return
  }
  func.func @transform_0(%arg0: i32) -> (i32, i32) {
    %c0_i32 = arith.constant 0 : i32
    %c0_i32_0 = arith.constant 0 : i32
    %c0_i32_1 = arith.constant 0 : i32
    return %c0_i32, %c0_i32_0 : i32, i32
  }
  func.func @transform_1(%arg0: i32) -> (i32, i32) {
    %c0_i32 = arith.constant 0 : i32
    %c0_i32_0 = arith.constant 0 : i32
    %c0_i32_1 = arith.constant 0 : i32
    return %c0_i32, %c0_i32_0 : i32, i32
  }
  func.func @transform_2(%arg0: i32) -> (i32, i32) {
    %c0_i32 = arith.constant 0 : i32
    %c0_i32_0 = arith.constant 0 : i32
    %c0_i32_1 = arith.constant 0 : i32
    return %c0_i32, %c0_i32_0 : i32, i32
  }
  func.func @transform_3(%arg0: i32) -> (i32, i32) {
    %c0_i32 = arith.constant 0 : i32
    %c0_i32_0 = arith.constant 0 : i32
    %c0_i32_1 = arith.constant 0 : i32
    return %c0_i32, %c0_i32_0 : i32, i32
  }
  func.func @transform_4(%arg0: i32) -> (i32, i32) {
    %c0_i32 = arith.constant 0 : i32
    %c0_i32_0 = arith.constant 0 : i32
    return %arg0, %c0_i32 : i32, i32
  }
  func.func @transform_5(%arg0: i32) -> (i32, i32) {
    %c0_i32 = arith.constant 0 : i32
    %c0_i32_0 = arith.constant 0 : i32
    return %arg0, %c0_i32 : i32, i32
  }
  func.func @transform_6(%arg0: i32) -> (i32, i32) {
    %c0_i32 = arith.constant 0 : i32
    %c0_i32_0 = arith.constant 0 : i32
    return %arg0, %c0_i32 : i32, i32
  }
  func.func @transform_7(%arg0: i32) -> (i32, i32) {
    %c0_i32 = arith.constant 0 : i32
    %c0_i32_0 = arith.constant 0 : i32
    return %arg0, %c0_i32 : i32, i32
  }
  func.func @transform_8(%arg0: i32) -> (i32, i32) {
    %c0_i32 = arith.constant 0 : i32
    %c0_i32_0 = arith.constant 0 : i32
    %c0_i32_1 = arith.constant 0 : i32
    return %c0_i32, %c0_i32_0 : i32, i32
  }
}

</mosaic_0001>

<llo_original>
// kernel: tpu_custom_call.1
$region0: #{tpu_custom_call.1}
  #allocation0 [shape = 'u32[]', space=smem, size = 0x4, offset = 0x4, fixed_abs, tag = 'smem constant byte address 0x4 - core index']
  #allocation1 [shape = 'u32[144,128]{1,0:T(1,128)}', space=vmem, size = 0x12000, scoped, tag = 'internal scratch']
  #allocation2 [shape = 'f32[32,16]{1,0:T(8,128)}', space=vmem, size = 0x4000, scoped, tag = 'scratch operand']
  #allocation3 [shape = 'f32[16,16]{1,0:T(8,128)}', space=vmem, size = 0x2000, scoped, tag = 'scratch operand']
  %s0 = inlined_call_operand.vmem [shape: f32[16,64], index: 0, kind: input, shape index: {}]
  %s1 = inlined_call_operand.vmem [shape: f32[16,64], index: 1, kind: input, shape index: {}]
  %s2 = inlined_call_operand.vmem [shape: f32[16,16], index: 2, kind: input, shape index: {}]
  %s3 = inlined_call_operand.vmem [shape: f32[16,16], index: 3, kind: input, shape index: {}]
  %s4 = inlined_call_operand.vmem [shape: s32[256,1], index: 4, kind: input, shape index: {}]
  %s5 = inlined_call_operand.vmem [shape: s32[256,1], index: 5, kind: input, shape index: {}]
  %s6 = inlined_call_operand.vmem [shape: s32[256,1], index: 6, kind: input, shape index: {}]
  %s7 = inlined_call_operand.vmem [shape: s32[256,1], index: 7, kind: input, shape index: {}]
  %s8 = inlined_call_operand.hbm [shape: f32[1,1], index: 8, kind: output, shape index: {}]
  %s9 = sld [smem:[#allocation0]]
  $region73: #{tpu_custom_call.1} parent=0
    _
  %s11 = ssub.s32 1, %s9
  %s12 = scalar_select 0, %s11, %s9
  $region1: #{tpu_custom_call.1} parent=0
    #allocation4 [shape = 'u8[512]{0}', space=vmem, size = 0x400, scoped, tag = 'output window, operand 0, single buffered']
    #allocation5 [shape = 's32[2]{0}', space=sflag, size = 0x8, scoped, tag = 'scoped memory for tpu_custom_call.1']
    %13 = vsyncpa [#allocation5], 0
    loop: start=0, step=1, limit=4
    $region2: #{tpu_custom_call.1} parent=1 // loop_pre_header
      _
    $region3: #{tpu_custom_call.1} parent=1 // loop_header
      %s15 = sphi 0, %s19
      %p16 = scmp.ge.s32.totalorder %s15, 4
      %s23 = sphi 0, %s23
      %s25 = sphi 0, %s23
      %s26 = sphi 0, %s25
      %s40 = sphi 0, %s26
      %s44 = sphi 0, %s44
      %s46 = sphi 0, %s44
      %s47 = sphi 0, %s46
      %s61 = sphi 0, %s47
      %s65 = sphi 0, %s65
      %s67 = sphi 0, %s65
      %s68 = sphi 0, %s67
      %s82 = sphi 0, %s68
      %s86 = sphi 0, %s86
      %s88 = sphi 0, %s86
      %s89 = sphi 0, %s88
      %s103 = sphi 0, %s89
      %s109 = sphi 0, %s111
      %s112 = sphi 0, %s109
      %s113 = sphi 0, %s112
      %s129 = sphi 0, %s113
      %s135 = sphi 0, %s137
      %s138 = sphi 0, %s135
      %s139 = sphi 0, %s138
      %s155 = sphi 0, %s139
      %s161 = sphi 0, %s163
      %s164 = sphi 0, %s161
      %s165 = sphi 0, %s164
      %s181 = sphi 0, %s165
      %s187 = sphi 0, %s189
      %s190 = sphi 0, %s187
      %s191 = sphi 0, %s190
      %s207 = sphi 0, %s191
      %s211 = sphi 0, %s211
      %s213 = sphi 0, %s211
      %s214 = sphi 0, %s213
      %s228 = sphi 0, %s214
    $region4: #{tpu_custom_call.1} parent=1 // loop_header_branch
      %18 = sbr.rel (%p16) target = $region8
    $region5: #{tpu_custom_call.1} parent=1 // loop_body
      %s20 = ssub.s32 %s15, 1
      %s21 = ssub.s32 %s15, 2
      %s22 = sadd.s32 %s15, 1
      %s24 = sadd.s32 %s23, 1
      %p27 = scmp.eq.s32.totalorder %s15, 1
      %p28 = scmp.ne.s32.totalorder %s23, %s25
      %p29 = scmp.eq.s32.totalorder %s15, 0
      %p30 = por %p28, %p29
      %p31 = scmp.ne.s32.totalorder %s23, %s25
      %p32 = scmp.eq.s32.totalorder %s20, 1
      %p33 = por %p31, %p32
      %p34 = scmp.ne.s32.totalorder %s25, %s26
      %p35 = scmp.eq.s32.totalorder %s20, 0
      %p36 = por %p34, %p35
      %p37 = scmp.ne.s32.totalorder %s25, %s26
      %p38 = scmp.eq.s32.totalorder %s21, 1
      %p39 = por %p37, %p38
      %p41 = scmp.ne.s32.totalorder %s26, %s40
      %p42 = scmp.eq.s32.totalorder %s21, 0
      %p43 = por %p41, %p42
      %s45 = sadd.s32 %s44, 1
      %p48 = scmp.eq.s32.totalorder %s15, 1
      %p49 = scmp.ne.s32.totalorder %s44, %s46
      %p50 = scmp.eq.s32.totalorder %s15, 0
      %p51 = por %p49, %p50
      %p52 = scmp.ne.s32.totalorder %s44, %s46
      %p53 = scmp.eq.s32.totalorder %s20, 1
      %p54 = por %p52, %p53
      %p55 = scmp.ne.s32.totalorder %s46, %s47
      %p56 = scmp.eq.s32.totalorder %s20, 0
      %p57 = por %p55, %p56
      %p58 = scmp.ne.s32.totalorder %s46, %s47
      %p59 = scmp.eq.s32.totalorder %s21, 1
      %p60 = por %p58, %p59
      %p62 = scmp.ne.s32.totalorder %s47, %s61
      %p63 = scmp.eq.s32.totalorder %s21, 0
      %p64 = por %p62, %p63
      %s66 = sadd.s32 %s65, 1
      %p69 = scmp.eq.s32.totalorder %s15, 1
      %p70 = scmp.ne.s32.totalorder %s65, %s67
      %p71 = scmp.eq.s32.totalorder %s15, 0
      %p72 = por %p70, %p71
      %p73 = scmp.ne.s32.totalorder %s65, %s67
      %p74 = scmp.eq.s32.totalorder %s20, 1
      %p75 = por %p73, %p74
      %p76 = scmp.ne.s32.totalorder %s67, %s68
      %p77 = scmp.eq.s32.totalorder %s20, 0
      %p78 = por %p76, %p77
      %p79 = scmp.ne.s32.totalorder %s67, %s68
      %p80 = scmp.eq.s32.totalorder %s21, 1
      %p81 = por %p79, %p80
      %p83 = scmp.ne.s32.totalorder %s68, %s82
      %p84 = scmp.eq.s32.totalorder %s21, 0
      %p85 = por %p83, %p84
      %s87 = sadd.s32 %s86, 1
      %p90 = scmp.eq.s32.totalorder %s15, 1
      %p91 = scmp.ne.s32.totalorder %s86, %s88
      %p92 = scmp.eq.s32.totalorder %s15, 0
      %p93 = por %p91, %p92
      %p94 = scmp.ne.s32.totalorder %s86, %s88
      %p95 = scmp.eq.s32.totalorder %s20, 1
      %p96 = por %p94, %p95
      %p97 = scmp.ne.s32.totalorder %s88, %s89
      %p98 = scmp.eq.s32.totalorder %s20, 0
      %p99 = por %p97, %p98
      %p100 = scmp.ne.s32.totalorder %s88, %s89
      %p101 = scmp.eq.s32.totalorder %s21, 1
      %p102 = por %p100, %p101
      %p104 = scmp.ne.s32.totalorder %s89, %s103
      %p105 = scmp.eq.s32.totalorder %s21, 0
      %p106 = por %p104, %p105
      %s107 = ssub.s32 %s15, %s22
      %p108 = scmp.eq.s32.totalorder %s107, 0
      %s110 = sadd.s32 %s109, 1
      %s111 = scalar_select %p108, %s109, %s110
      %p114 = pneg %p108
      %p115 = scmp.eq.s32.totalorder %s15, 1
      %p116 = por %p114, %p115
      %p117 = scmp.ne.s32.totalorder %s109, %s112
      %p118 = scmp.eq.s32.totalorder %s15, 0
      %p119 = por %p117, %p118
      %p120 = scmp.ne.s32.totalorder %s109, %s112
      %p121 = scmp.eq.s32.totalorder %s20, 1
      %p122 = por %p120, %p121
      %p123 = scmp.ne.s32.totalorder %s112, %s113
      %p124 = scmp.eq.s32.totalorder %s20, 0
      %p125 = por %p123, %p124
      %p126 = scmp.ne.s32.totalorder %s112, %s113
      %p127 = scmp.eq.s32.totalorder %s21, 1
      %p128 = por %p126, %p127
      %p130 = scmp.ne.s32.totalorder %s113, %s129
      %p131 = scmp.eq.s32.totalorder %s21, 0
      %p132 = por %p130, %p131
      %s133 = ssub.s32 %s15, %s22
      %p134 = scmp.eq.s32.totalorder %s133, 0
      %s136 = sadd.s32 %s135, 1
      %s137 = scalar_select %p134, %s135, %s136
      %p140 = pneg %p134
      %p141 = scmp.eq.s32.totalorder %s15, 1
      %p142 = por %p140, %p141
      %p143 = scmp.ne.s32.totalorder %s135, %s138
      %p144 = scmp.eq.s32.totalorder %s15, 0
      %p145 = por %p143, %p144
      %p146 = scmp.ne.s32.totalorder %s135, %s138
      %p147 = scmp.eq.s32.totalorder %s20, 1
      %p148 = por %p146, %p147
      %p149 = scmp.ne.s32.totalorder %s138, %s139
      %p150 = scmp.eq.s32.totalorder %s20, 0
      %p151 = por %p149, %p150
      %p152 = scmp.ne.s32.totalorder %s138, %s139
      %p153 = scmp.eq.s32.totalorder %s21, 1
      %p154 = por %p152, %p153
      %p156 = scmp.ne.s32.totalorder %s139, %s155
      %p157 = scmp.eq.s32.totalorder %s21, 0
      %p158 = por %p156, %p157
      %s159 = ssub.s32 %s15, %s22
      %p160 = scmp.eq.s32.totalorder %s159, 0
      %s162 = sadd.s32 %s161, 1
      %s163 = scalar_select %p160, %s161, %s162
      %p166 = pneg %p160
      %p167 = scmp.eq.s32.totalorder %s15, 1
      %p168 = por %p166, %p167
      %p169 = scmp.ne.s32.totalorder %s161, %s164
      %p170 = scmp.eq.s32.totalorder %s15, 0
      %p171 = por %p169, %p170
      %p172 = scmp.ne.s32.totalorder %s161, %s164
      %p173 = scmp.eq.s32.totalorder %s20, 1
      %p174 = por %p172, %p173
      %p175 = scmp.ne.s32.totalorder %s164, %s165
      %p176 = scmp.eq.s32.totalorder %s20, 0
      %p177 = por %p175, %p176
      %p178 = scmp.ne.s32.totalorder %s164, %s165
      %p179 = scmp.eq.s32.totalorder %s21, 1
      %p180 = por %p178, %p179
      %p182 = scmp.ne.s32.totalorder %s165, %s181
      %p183 = scmp.eq.s32.totalorder %s21, 0
      %p184 = por %p182, %p183
      %s185 = ssub.s32 %s15, %s22
      %p186 = scmp.eq.s32.totalorder %s185, 0
      %s188 = sadd.s32 %s187, 1
      %s189 = scalar_select %p186, %s187, %s188
      %p192 = pneg %p186
      %p193 = scmp.eq.s32.totalorder %s15, 1
      %p194 = por %p192, %p193
      %p195 = scmp.ne.s32.totalorder %s187, %s190
      %p196 = scmp.eq.s32.totalorder %s15, 0
      %p197 = por %p195, %p196
      %p198 = scmp.ne.s32.totalorder %s187, %s190
      %p199 = scmp.eq.s32.totalorder %s20, 1
      %p200 = por %p198, %p199
      %p201 = scmp.ne.s32.totalorder %s190, %s191
      %p202 = scmp.eq.s32.totalorder %s20, 0
      %p203 = por %p201, %p202
      %p204 = scmp.ne.s32.totalorder %s190, %s191
      %p205 = scmp.eq.s32.totalorder %s21, 1
      %p206 = por %p204, %p205
      %p208 = scmp.ne.s32.totalorder %s191, %s207
      %p209 = scmp.eq.s32.totalorder %s21, 0
      %p210 = por %p208, %p209
      %s212 = sadd.s32 %s211, 1
      %p215 = scmp.eq.s32.totalorder %s15, 1
      %p216 = scmp.ne.s32.totalorder %s211, %s213
      %p217 = scmp.eq.s32.totalorder %s15, 0
      %p218 = por %p216, %p217
      %p219 = scmp.ne.s32.totalorder %s211, %s213
      %p220 = scmp.eq.s32.totalorder %s20, 1
      %p221 = por %p219, %p220
      %p222 = scmp.ne.s32.totalorder %s213, %s214
      %p223 = scmp.eq.s32.totalorder %s20, 0
      %p224 = por %p222, %p223
      %p225 = scmp.ne.s32.totalorder %s213, %s214
      %p226 = scmp.eq.s32.totalorder %s21, 1
      %p227 = por %p225, %p226
      %p229 = scmp.ne.s32.totalorder %s214, %s228
      %p230 = scmp.eq.s32.totalorder %s21, 0
      %p231 = por %p229, %p230
      %p232 = scmp.le.s32.totalorder 1, %s15
      %p233 = scmp.lt.s32.totalorder %s15, 3
      %p234 = pnand %p232, %p233
      %p235 = pneg %p234
      // Predicated region
      $region9: #{tpu_custom_call.1} parent=5 // pred_check
        _
      $region10: #{tpu_custom_call.1} parent=5 // pred_check_branch
        %237 = sbr.rel (%p234) target = $region12
      $region11: #{tpu_custom_call.1} parent=5 // pred_region
        %s238 = ssub.s32 %s15, 1
        // Predicated region
        $region13: #{tpu_custom_call.1} parent=11 // pred_check
          %p239 = pneg %p36
        $region14: #{tpu_custom_call.1} parent=11 // pred_check_branch
          %241 = sbr.rel (%p239) target = $region16
        $region15: #{tpu_custom_call.1} parent=11 // pred_region
          _
        $region16: #{tpu_custom_call.1} parent=11 // pred_fallthru
          _
        // Predicated region
        $region17: #{tpu_custom_call.1} parent=11 // pred_check
          %p242 = pneg %p57
        $region18: #{tpu_custom_call.1} parent=11 // pred_check_branch
          %244 = sbr.rel (%p242) target = $region20
        $region19: #{tpu_custom_call.1} parent=11 // pred_region
          _
        $region20: #{tpu_custom_call.1} parent=11 // pred_fallthru
          _
        // Predicated region
        $region21: #{tpu_custom_call.1} parent=11 // pred_check
          %p245 = pneg %p78
        $region22: #{tpu_custom_call.1} parent=11 // pred_check_branch
          %247 = sbr.rel (%p245) target = $region24
        $region23: #{tpu_custom_call.1} parent=11 // pred_region
          _
        $region24: #{tpu_custom_call.1} parent=11 // pred_fallthru
          _
        // Predicated region
        $region25: #{tpu_custom_call.1} parent=11 // pred_check
          %p248 = pneg %p99
        $region26: #{tpu_custom_call.1} parent=11 // pred_check_branch
          %250 = sbr.rel (%p248) target = $region28
        $region27: #{tpu_custom_call.1} parent=11 // pred_region
          _
        $region28: #{tpu_custom_call.1} parent=11 // pred_fallthru
          _
      $region12: #{tpu_custom_call.1} parent=5 // pred_fallthru
        _
      %p251 = scmp.lt.s32.totalorder %s15, 2
      // Predicated region
      $region29: #{tpu_custom_call.1} parent=5 // pred_check
        %p252 = pneg %p251
      $region30: #{tpu_custom_call.1} parent=5 // pred_check_branch
        %254 = sbr.rel (%p252) target = $region32
      $region31: #{tpu_custom_call.1} parent=5 // pred_region
        // Predicated region
        $region33: #{tpu_custom_call.1} parent=31 // pred_check
          %p255 = pneg %p119
        $region34: #{tpu_custom_call.1} parent=31 // pred_check_branch
          %257 = sbr.rel (%p255) target = $region36
        $region35: #{tpu_custom_call.1} parent=31 // pred_region
          %s258 = smul.u32 16, %s15
          %p259 = scmp.lt.s32.totalorder %s258, 31
          %s260 = scalar_select %p259, %s258, 31
          %s261 = smul.addr %s260, 8
          %s262 = scalar_lea.vmem %s4, %s261
          %s263 = smul.u32 16, %s15
        $region36: #{tpu_custom_call.1} parent=31 // pred_fallthru
          _
        // Predicated region
        $region37: #{tpu_custom_call.1} parent=31 // pred_check
          %p264 = pneg %p145
        $region38: #{tpu_custom_call.1} parent=31 // pred_check_branch
          %266 = sbr.rel (%p264) target = $region40
        $region39: #{tpu_custom_call.1} parent=31 // pred_region
          %s267 = smul.u32 16, %s15
          %p268 = scmp.lt.s32.totalorder %s267, 31
          %s269 = scalar_select %p268, %s267, 31
          %s270 = smul.addr %s269, 8
          %s271 = scalar_lea.vmem %s5, %s270
          %s272 = smul.u32 16, %s15
        $region40: #{tpu_custom_call.1} parent=31 // pred_fallthru
          _
        // Predicated region
        $region41: #{tpu_custom_call.1} parent=31 // pred_check
          %p273 = pneg %p171
        $region42: #{tpu_custom_call.1} parent=31 // pred_check_branch
          %275 = sbr.rel (%p273) target = $region44
        $region43: #{tpu_custom_call.1} parent=31 // pred_region
          %s276 = smul.u32 16, %s15
          %p277 = scmp.lt.s32.totalorder %s276, 31
          %s278 = scalar_select %p277, %s276, 31
          %s279 = smul.addr %s278, 8
          %s280 = scalar_lea.vmem %s6, %s279
          %s281 = smul.u32 16, %s15
        $region44: #{tpu_custom_call.1} parent=31 // pred_fallthru
          _
        // Predicated region
        $region45: #{tpu_custom_call.1} parent=31 // pred_check
          %p282 = pneg %p197
        $region46: #{tpu_custom_call.1} parent=31 // pred_check_branch
          %284 = sbr.rel (%p282) target = $region48
        $region47: #{tpu_custom_call.1} parent=31 // pred_region
          %s285 = smul.u32 16, %s15
          %p286 = scmp.lt.s32.totalorder %s285, 31
          %s287 = scalar_select %p286, %s285, 31
          %s288 = smul.addr %s287, 8
          %s289 = scalar_lea.vmem %s7, %s288
          %s290 = smul.u32 16, %s15
        $region48: #{tpu_custom_call.1} parent=31 // pred_fallthru
          _
      $region32: #{tpu_custom_call.1} parent=5 // pred_fallthru
        _
      %p291 = scmp.le.s32.totalorder 1, %s15
      %p292 = scmp.lt.s32.totalorder %s15, 3
      %p293 = pnand %p291, %p292
      %p294 = pneg %p293
      // Predicated region
      $region49: #{tpu_custom_call.1} parent=5 // pred_check
        _
      $region50: #{tpu_custom_call.1} parent=5 // pred_check_branch
        %296 = sbr.rel (%p293) target = $region52
      $region51: #{tpu_custom_call.1} parent=5 // pred_region
        %s297 = ssub.s32 %s15, 1
        %p298 = pneg %p36
        %p299 = pneg %p33
        %p300 = pneg %p57
        %p301 = pneg %p54
        %p302 = pneg %p78
        %p303 = pneg %p75
        %p304 = pneg %p99
        %p305 = pneg %p96
        %s306 = smul.u32 16, %s20
        %p307 = scmp.lt.s32.totalorder %s306, 31
        %s308 = scalar_select %p307, %s306, 31
        %s309 = smul.addr %s308, 8
        %s310 = scalar_lea.vmem %s4, %s309
        %p311 = pneg %p125
        %p312 = pneg %p122
        %s313 = smul.u32 16, %s20
        %p314 = scmp.lt.s32.totalorder %s313, 31
        %s315 = scalar_select %p314, %s313, 31
        %s316 = smul.addr %s315, 8
        %s317 = scalar_lea.vmem %s5, %s316
        %p318 = pneg %p151
        %p319 = pneg %p148
        %s320 = smul.u32 16, %s20
        %p321 = scmp.lt.s32.totalorder %s320, 31
        %s322 = scalar_select %p321, %s320, 31
        %s323 = smul.addr %s322, 8
        %s324 = scalar_lea.vmem %s6, %s323
        %p325 = pneg %p177
        %p326 = pneg %p174
        %s327 = smul.u32 16, %s20
        %p328 = scmp.lt.s32.totalorder %s327, 31
        %s329 = scalar_select %p328, %s327, 31
        %s330 = smul.addr %s329, 8
        %s331 = scalar_lea.vmem %s7, %s330
        %p332 = pneg %p203
        %p333 = pneg %p200
        %p334 = pneg %p224
        %p335 = pneg %p221
        %s336 = smul.u32 16, %s20
        %p337 = scmp.lt.s32.totalorder %s336, 31
        %s338 = scalar_select %p337, %s336, 31
        %s339 = smul.addr %s338, 8
        %s340 = scalar_lea.vmem %s4, %s339
        %s341 = smul.u32 16, %s20
        %s342 = smul.u32 16, %s20
        %p343 = scmp.lt.s32.totalorder %s342, 31
        %s344 = scalar_select %p343, %s342, 31
        %s345 = smul.addr %s344, 8
        %s346 = scalar_lea.vmem %s5, %s345
        %s347 = smul.u32 16, %s20
        %s348 = smul.u32 16, %s20
        %p349 = scmp.lt.s32.totalorder %s348, 31
        %s350 = scalar_select %p349, %s348, 31
        %s351 = smul.addr %s350, 8
        %s352 = scalar_lea.vmem %s6, %s351
        %s353 = smul.u32 16, %s20
        %s354 = smul.u32 16, %s20
        %p355 = scmp.lt.s32.totalorder %s354, 31
        %s356 = scalar_select %p355, %s354, 31
        %s357 = smul.addr %s356, 8
        %s358 = scalar_lea.vmem %s7, %s357
        %s359 = smul.u32 16, %s20
        %p360 = scmp.eq.s32.totalorder %s20, 0
        // Predicated region
        $region53: #{tpu_custom_call.1} parent=51 // pred_check
          %p361 = pneg %p360
        $region54: #{tpu_custom_call.1} parent=51 // pred_check_branch
          %363 = sbr.rel (%p361) target = $region56
        $region55: #{tpu_custom_call.1} parent=51 // pred_region
          %v364 = vld [vmem:[%s0] sm:$0xff]
          %v365 = vld [vmem:[%s0 + $0x8] sm:$0xff]
          %v366 = vmul.f32 %v364, %v364
          %v367 = vmul.f32 %v365, %v365
          %vm368 = vcmask 523264
          %v369 = vsel %vm368, %v366, 0.0
          %370 = vadd.xlane.f32.xlu0 %v369
          %v371 = vpop.xlane.xlu0 %370
          %v372 = vsel %vm368, %v367, 0.0
          %373 = vadd.xlane.f32.xlu0 %v372
          %v374 = vpop.xlane.xlu0 %373
          %v375 = vmax.f32 %v371, 1e-24
          %v376 = vmax.f32 %v374, 1e-24
          %v377 = vrsqrt.pop %v375
          %v378 = vrsqrt.pop %v376
          %v379 = vmul.f32 %v364, %v377
          %v380 = vmul.f32 %v365, %v378
          %v381 = vld [vmem:[%s1] sm:$0xff]
          %v382 = vld [vmem:[%s1 + $0x8] sm:$0xff]
          %v383 = vmul.f32 %v381, %v381
          %v384 = vmul.f32 %v382, %v382
          %v385 = vsel %vm368, %v383, 0.0
          %386 = vadd.xlane.f32.xlu0 %v385
          %v387 = vpop.xlane.xlu0 %386
          %v388 = vsel %vm368, %v384, 0.0
          %389 = vadd.xlane.f32.xlu0 %v388
          %v390 = vpop.xlane.xlu0 %389
          %v391 = vmax.f32 %v387, 1e-24
          %v392 = vmax.f32 %v390, 1e-24
          %v393 = vrsqrt.pop %v391
          %v394 = vrsqrt.pop %v392
          %v395 = vmul.f32 %v381, %v393
          %v396 = vmul.f32 %v382, %v394
          %v398 = vsel %vm368, %v379, 0
          %v401 = vsel %vm368, %v380, 0
          %403 = vmatprep.subr.mxu0 0.0
          %404 = vmatpush1.xpose.msra.mxu0 %v398
          %405 = vmatprep.subr.mxu0 0.0
          %406 = vmatpush1.xpose.msra.mxu0 %v401
          %407 = vmatprep.subr.mxu0 0.0
          %408 = vmatpush1.xpose.msra.mxu0 0.0
          %409 = vmatprep.subr.mxu0 0.0
          %410 = vmatpush1.xpose.msra.mxu0 0.0
          %411 = vmatprep.subr.mxu0 0.0
          %412 = vmatpush1.xpose.msra.mxu0 0.0
          %413 = vmatprep.subr.mxu0 0.0
          %414 = vmatpush1.xpose.msra.mxu0 0.0
          %415 = vmatprep.subr.mxu0 0.0
          %416 = vmatpush1.xpose.msra.mxu0 0.0
          %417 = vmatprep.subr.mxu0 0.0
          %418 = vmatpush1.xpose.msra.mxu0 0.0
          %419 = vmatprep.subr.mxu0 0.0
          %420 = vmatpush1.xpose.msra.mxu0 0.0
          %421 = vmatprep.subr.mxu0 0.0
          %422 = vmatpush1.xpose.msra.mxu0 0.0
          %423 = vmatprep.subr.mxu0 0.0
          %424 = vmatpush1.xpose.msra.mxu0 0.0
          %425 = vmatprep.subr.mxu0 0.0
          %426 = vmatpush1.xpose.msra.mxu0 0.0
          %427 = vmatprep.subr.mxu0 0.0
          %428 = vmatpush1.xpose.msra.mxu0 0.0
          %429 = vmatprep.subr.mxu0 0.0
          %430 = vmatpush1.xpose.msra.mxu0 0.0
          %431 = vmatprep.subr.mxu0 0.0
          %432 = vmatpush1.xpose.msra.mxu0 0.0
          %433 = vmatprep.subr.mxu0 0.0
          %434 = vmatpush1.xpose.msra.mxu0 0.0
          %435 = vmatprep.subr.mxu0 0.0
          %436 = vmatpush1.xpose.msra.mxu0 0.0
          %437 = vmatprep.subr.mxu0 0.0
          %438 = vmatpush1.xpose.msra.mxu0 0.0
          %439 = vmatprep.subr.mxu0 0.0
          %440 = vmatpush1.xpose.msra.mxu0 0.0
          %441 = vmatprep.subr.mxu0 0.0
          %442 = vmatpush1.xpose.msra.mxu0 0.0
          %443 = vmatprep.subr.mxu0 0.0
          %444 = vmatpush1.xpose.msra.mxu0 0.0
          %445 = vmatprep.subr.mxu0 0.0
          %446 = vmatpush1.xpose.msra.mxu0 0.0
          %447 = vmatprep.subr.mxu0 0.0
          %448 = vmatpush1.xpose.msra.mxu0 0.0
          %449 = vmatprep.subr.mxu0 0.0
          %450 = vmatpush1.xpose.msra.mxu0 0.0
          %451 = vmatprep.subr.mxu0 0.0
          %452 = vmatpush1.xpose.msra.mxu0 0.0
          %453 = vmatprep.subr.mxu0 0.0
          %454 = vmatpush1.xpose.msra.mxu0 0.0
          %455 = vmatprep.subr.mxu0 0.0
          %456 = vmatpush1.xpose.msra.mxu0 0.0
          %457 = vmatprep.subr.mxu0 0.0
          %458 = vmatpush1.xpose.msra.mxu0 0.0
          %459 = vmatprep.subr.mxu0 0.0
          %460 = vmatpush1.xpose.msra.mxu0 0.0
          %461 = vmatprep.subr.mxu0 0.0
          %462 = vmatpush1.xpose.msra.mxu0 0.0
          %463 = vmatprep.subr.mxu0 0.0
          %464 = vmatpush1.xpose.msra.mxu0 0.0
          %465 = vmatprep.subr.mxu0 0.0
          %466 = vmatpush1.xpose.msra.mxu0 0.0
          %467 = vmatprep.mubr.f32.mxu0 0.0
          %468 = vmatmul.mubr.f32.gmra.mrb[0].mxu0 %v398
          %v469 = vpop.f32.mrb[0].mxu0
          %v470 = vadd.f32 0.0, %v469
          %v471 = vpop.f32.mrb[0].mxu0
          %472 = vmatprep.mubr.f32.mxu0 0.0
          %473 = vmatmul.mubr.f32.gmra.mrb[0].mxu0 %v401
          %v474 = vpop.f32.mrb[0].mxu0
          %v475 = vadd.f32 0.0, %v474
          %v476 = vpop.f32.mrb[0].mxu0
          %477 = vdwg.mxu0
          %v479 = vsel %vm368, %v395, 0
          %v482 = vsel %vm368, %v396, 0
          %484 = vmatprep.subr.mxu0 0.0
          %485 = vmatpush1.xpose.msra.mxu0 %v479
          %486 = vmatprep.subr.mxu0 0.0
          %487 = vmatpush1.xpose.msra.mxu0 %v482
          %488 = vmatprep.subr.mxu0 0.0
          %489 = vmatpush1.xpose.msra.mxu0 0.0
          %490 = vmatprep.subr.mxu0 0.0
          %491 = vmatpush1.xpose.msra.mxu0 0.0
          %492 = vmatprep.subr.mxu0 0.0
          %493 = vmatpush1.xpose.msra.mxu0 0.0
          %494 = vmatprep.subr.mxu0 0.0
          %495 = vmatpush1.xpose.msra.mxu0 0.0
          %496 = vmatprep.subr.mxu0 0.0
          %497 = vmatpush1.xpose.msra.mxu0 0.0
          %498 = vmatprep.subr.mxu0 0.0
          %499 = vmatpush1.xpose.msra.mxu0 0.0
          %500 = vmatprep.subr.mxu0 0.0
          %501 = vmatpush1.xpose.msra.mxu0 0.0
          %502 = vmatprep.subr.mxu0 0.0
          %503 = vmatpush1.xpose.msra.mxu0 0.0
          %504 = vmatprep.subr.mxu0 0.0
          %505 = vmatpush1.xpose.msra.mxu0 0.0
          %506 = vmatprep.subr.mxu0 0.0
          %507 = vmatpush1.xpose.msra.mxu0 0.0
          %508 = vmatprep.subr.mxu0 0.0
          %509 = vmatpush1.xpose.msra.mxu0 0.0
          %510 = vmatprep.subr.mxu0 0.0
          %511 = vmatpush1.xpose.msra.mxu0 0.0
          %512 = vmatprep.subr.mxu0 0.0
          %513 = vmatpush1.xpose.msra.mxu0 0.0
          %514 = vmatprep.subr.mxu0 0.0
          %515 = vmatpush1.xpose.msra.mxu0 0.0
          %516 = vmatprep.subr.mxu0 0.0
          %517 = vmatpush1.xpose.msra.mxu0 0.0
          %518 = vmatprep.subr.mxu0 0.0
          %519 = vmatpush1.xpose.msra.mxu0 0.0
          %520 = vmatprep.subr.mxu0 0.0
          %521 = vmatpush1.xpose.msra.mxu0 0.0
          %522 = vmatprep.subr.mxu0 0.0
          %523 = vmatpush1.xpose.msra.mxu0 0.0
          %524 = vmatprep.subr.mxu0 0.0
          %525 = vmatpush1.xpose.msra.mxu0 0.0
          %526 = vmatprep.subr.mxu0 0.0
          %527 = vmatpush1.xpose.msra.mxu0 0.0
          %528 = vmatprep.subr.mxu0 0.0
          %529 = vmatpush1.xpose.msra.mxu0 0.0
          %530 = vmatprep.subr.mxu0 0.0
          %531 = vmatpush1.xpose.msra.mxu0 0.0
          %532 = vmatprep.subr.mxu0 0.0
          %533 = vmatpush1.xpose.msra.mxu0 0.0
          %534 = vmatprep.subr.mxu0 0.0
          %535 = vmatpush1.xpose.msra.mxu0 0.0
          %536 = vmatprep.subr.mxu0 0.0
          %537 = vmatpush1.xpose.msra.mxu0 0.0
          %538 = vmatprep.subr.mxu0 0.0
          %539 = vmatpush1.xpose.msra.mxu0 0.0
          %540 = vmatprep.subr.mxu0 0.0
          %541 = vmatpush1.xpose.msra.mxu0 0.0
          %542 = vmatprep.subr.mxu0 0.0
          %543 = vmatpush1.xpose.msra.mxu0 0.0
          %544 = vmatprep.subr.mxu0 0.0
          %545 = vmatpush1.xpose.msra.mxu0 0.0
          %546 = vmatprep.subr.mxu0 0.0
          %547 = vmatpush1.xpose.msra.mxu0 0.0
          %548 = vmatprep.mubr.f32.mxu0 0.0
          %549 = vmatmul.mubr.f32.gmra.mrb[0].mxu0 %v479
          %v550 = vpop.f32.mrb[0].mxu0
          %v551 = vadd.f32 0.0, %v550
          %v552 = vpop.f32.mrb[0].mxu0
          %553 = vmatprep.mubr.f32.mxu0 0.0
          %554 = vmatmul.mubr.f32.gmra.mrb[0].mxu0 %v482
          %v555 = vpop.f32.mrb[0].mxu0
          %v556 = vadd.f32 0.0, %v555
          %v557 = vpop.f32.mrb[0].mxu0
          %558 = vdwg.mxu0
          %v559 = vsub.f32 %v470, %v551
          %v560 = vsub.f32 %v475, %v556
          %v561 = vand.u32 2147483647, %v559
          %v562 = vand.u32 2147483647, %v560
          %vm563 = vcmp.lt.f32.partialorder %v561, 1.0
          %vm564 = vcmp.lt.f32.partialorder %v562, 1.0
          %v565 = vmul.f32 %v559, 0.5
          %v566 = vmul.f32 %v560, 0.5
          %v567 = vmul.f32 %v565, %v559
          %v568 = vmul.f32 %v566, %v560
          %v569 = vsub.f32 %v561, 0.5
          %v570 = vsub.f32 %v562, 0.5
          %v571 = vsel %vm563, %v567, %v569
          %v572 = vsel %vm564, %v568, %v570
          %vm573 = vcmask 130048
          %574 = vst.msk [vmem:[#allocation3] sm:$0xff] %vm573, %v571
          %575 = vst.msk [vmem:[#allocation3 + $0x8] sm:$0xff] %vm573, %v572
          %v576 = vmul.f32 %v470, -1.0
          %v577 = vmul.f32 %v475, -1.0
          %v578 = vmul.f32 %v576, 1.442695
          %v579 = vpow.pop %v578
          %v580 = vmul.f32 %v577, 1.442695
          %v581 = vpow.pop %v580
          %v582 = vld [vmem:[%s2] sm:$0xff]
          %v583 = vld [vmem:[%s2 + $0x8] sm:$0xff]
          %v584 = vmul.f32 %v579, %v582
          %v585 = vmul.f32 %v581, %v583
          %v586 = vsel %vm573, %v584, 0.0
          %587 = vadd.xlane.f32.xlu0 %v586
          %v588 = vpop.xlane.xlu0 %587
          %v589 = vsel %vm573, %v585, 0.0
          %590 = vadd.xlane.f32.xlu0 %v589
          %v591 = vpop.xlane.xlu0 %590
          %v592 = vadd.f32 %v588, 1.0
          %v593 = vadd.f32 %v591, 1.0
          %v594 = vrcp.pop %v592
          %v595 = vmul.f32 1.0, %v594
          %v596 = vrcp.pop %v593
          %v597 = vmul.f32 1.0, %v596
          %v598 = vmul.f32 %v579, %v595
          %v599 = vmul.f32 %v581, %v597
          %v600 = vmul.f32 %v470, 50.0
          %v601 = vmul.f32 %v475, 50.0
          %v602 = vmul.f32 %v600, 1.442695
          %v603 = vpow.pop %v602
          %v604 = vmul.f32 %v601, 1.442695
          %v605 = vpow.pop %v604
          %v606 = vld [vmem:[%s3] sm:$0xff]
          %v607 = vld [vmem:[%s3 + $0x8] sm:$0xff]
          %v608 = vmul.f32 %v603, %v606
          %v609 = vmul.f32 %v605, %v607
          %v610 = vsel %vm573, %v608, 0.0
          %611 = vadd.xlane.f32.xlu0 %v610
          %v612 = vpop.xlane.xlu0 %611
          %v613 = vsel %vm573, %v609, 0.0
          %614 = vadd.xlane.f32.xlu0 %v613
          %v615 = vpop.xlane.xlu0 %614
          %v616 = vadd.f32 %v612, 1.0
          %v617 = vadd.f32 %v615, 1.0
          %v618 = vrcp.pop %v616
          %v619 = vmul.f32 1.0, %v618
          %v620 = vrcp.pop %v617
          %v621 = vmul.f32 1.0, %v620
          %v622 = vmul.f32 %v603, %v619
          %v623 = vmul.f32 %v605, %v621
          %624 = vst.msk [vmem:[#allocation2] sm:$0xff] %vm573, %v598
          %625 = vst.msk [vmem:[#allocation2 + $0x8] sm:$0xff] %vm573, %v599
          %626 = vst.msk [vmem:[#allocation2 + $0x10] sm:$0xff] %vm573, %v622
          %627 = vst.msk [vmem:[#allocation2 + $0x18] sm:$0xff] %vm573, %v623
          %vm628 = vcmask 0
          %629 = vst.msk [vmem:[#allocation4] sm:$0x1] %vm628, 0.0
        $region56: #{tpu_custom_call.1} parent=51 // pred_fallthru
          _
        %v630 = vlaneseq
        %v631 = vand.u32 %v630, 127
        %v632 = vld [vmem:[%s340] sm:$0xff]
        %v633 = vld [vmem:[%s340 + $0x8] sm:$0xff]
        %v634 = vld [vmem:[%s340 + $0x10] sm:$0xff]
        %v635 = vld [vmem:[%s340 + $0x18] sm:$0xff]
        %v636 = vld [vmem:[%s340 + $0x20] sm:$0xff]
        %v637 = vld [vmem:[%s340 + $0x28] sm:$0xff]
        %v638 = vld [vmem:[%s340 + $0x30] sm:$0xff]
        %v639 = vld [vmem:[%s340 + $0x38] sm:$0xff]
        %v640 = vld [vmem:[%s340 + $0x40] sm:$0xff]
        %v641 = vld [vmem:[%s340 + $0x48] sm:$0xff]
        %v642 = vld [vmem:[%s340 + $0x50] sm:$0xff]
        %v643 = vld [vmem:[%s340 + $0x58] sm:$0xff]
        %v644 = vld [vmem:[%s340 + $0x60] sm:$0xff]
        %v645 = vld [vmem:[%s340 + $0x68] sm:$0xff]
        %v646 = vld [vmem:[%s340 + $0x70] sm:$0xff]
        %v647 = vld [vmem:[%s340 + $0x78] sm:$0xff]
        %648 = vset.pattern.permute.xlu0 0
        %649 = vperm.xlu0 %648, %v632
        %v650 = vpop.permute.xlu0 %649
        %651 = vset.pattern.permute.xlu0 0
        %652 = vperm.xlu0 %651, %v633
        %v653 = vpop.permute.xlu0 %652
        %654 = vset.pattern.permute.xlu0 0
        %655 = vperm.xlu0 %654, %v634
        %v656 = vpop.permute.xlu0 %655
        %657 = vset.pattern.permute.xlu0 0
        %658 = vperm.xlu0 %657, %v635
        %v659 = vpop.permute.xlu0 %658
        %660 = vset.pattern.permute.xlu0 0
        %661 = vperm.xlu0 %660, %v636
        %v662 = vpop.permute.xlu0 %661
        %663 = vset.pattern.permute.xlu0 0
        %664 = vperm.xlu0 %663, %v637
        %v665 = vpop.permute.xlu0 %664
        %666 = vset.pattern.permute.xlu0 0
        %667 = vperm.xlu0 %666, %v638
        %v668 = vpop.permute.xlu0 %667
        %669 = vset.pattern.permute.xlu0 0
        %670 = vperm.xlu0 %669, %v639
        %v671 = vpop.permute.xlu0 %670
        %672 = vset.pattern.permute.xlu0 0
        %673 = vperm.xlu0 %672, %v640
        %v674 = vpop.permute.xlu0 %673
        %675 = vset.pattern.permute.xlu0 0
        %676 = vperm.xlu0 %675, %v641
        %v677 = vpop.permute.xlu0 %676
        %678 = vset.pattern.permute.xlu0 0
        %679 = vperm.xlu0 %678, %v642
        %v680 = vpop.permute.xlu0 %679
        %681 = vset.pattern.permute.xlu0 0
        %682 = vperm.xlu0 %681, %v643
        %v683 = vpop.permute.xlu0 %682
        %684 = vset.pattern.permute.xlu0 0
        %685 = vperm.xlu0 %684, %v644
        %v686 = vpop.permute.xlu0 %685
        %687 = vset.pattern.permute.xlu0 0
        %688 = vperm.xlu0 %687, %v645
        %v689 = vpop.permute.xlu0 %688
        %690 = vset.pattern.permute.xlu0 0
        %691 = vperm.xlu0 %690, %v646
        %v692 = vpop.permute.xlu0 %691
        %693 = vset.pattern.permute.xlu0 0
        %694 = vperm.xlu0 %693, %v647
        %v695 = vpop.permute.xlu0 %694
        %vm696 = vcmp.eq.s32.totalorder %v650, %v631
        %vm697 = vcmp.eq.s32.totalorder %v653, %v631
        %vm698 = vcmp.eq.s32.totalorder %v656, %v631
        %vm699 = vcmp.eq.s32.totalorder %v659, %v631
        %vm700 = vcmp.eq.s32.totalorder %v662, %v631
        %vm701 = vcmp.eq.s32.totalorder %v665, %v631
        %vm702 = vcmp.eq.s32.totalorder %v668, %v631
        %vm703 = vcmp.eq.s32.totalorder %v671, %v631
        %vm704 = vcmp.eq.s32.totalorder %v674, %v631
        %vm705 = vcmp.eq.s32.totalorder %v677, %v631
        %vm706 = vcmp.eq.s32.totalorder %v680, %v631
        %vm707 = vcmp.eq.s32.totalorder %v683, %v631
        %vm708 = vcmp.eq.s32.totalorder %v686, %v631
        %vm709 = vcmp.eq.s32.totalorder %v689, %v631
        %vm710 = vcmp.eq.s32.totalorder %v692, %v631
        %vm711 = vcmp.eq.s32.totalorder %v695, %v631
        %v712 = vsel %vm696, 1, 0
        %v713 = vsel %vm697, 1, 0
        %v714 = vsel %vm698, 1, 0
        %v715 = vsel %vm699, 1, 0
        %v716 = vsel %vm700, 1, 0
        %v717 = vsel %vm701, 1, 0
        %v718 = vsel %vm702, 1, 0
        %v719 = vsel %vm703, 1, 0
        %v720 = vsel %vm704, 1, 0
        %v721 = vsel %vm705, 1, 0
        %v722 = vsel %vm706, 1, 0
        %v723 = vsel %vm707, 1, 0
        %v724 = vsel %vm708, 1, 0
        %v725 = vsel %vm709, 1, 0
        %v726 = vsel %vm710, 1, 0
        %v727 = vsel %vm711, 1, 0
        %v728 = vcvt.s32.f32 %v712
        %v729 = vcvt.s32.f32 %v713
        %v730 = vcvt.s32.f32 %v714
        %v731 = vcvt.s32.f32 %v715
        %v732 = vcvt.s32.f32 %v716
        %v733 = vcvt.s32.f32 %v717
        %v734 = vcvt.s32.f32 %v718
        %v735 = vcvt.s32.f32 %v719
        %v736 = vcvt.s32.f32 %v720
        %v737 = vcvt.s32.f32 %v721
        %v738 = vcvt.s32.f32 %v722
        %v739 = vcvt.s32.f32 %v723
        %v740 = vcvt.s32.f32 %v724
        %v741 = vcvt.s32.f32 %v725
        %v742 = vcvt.s32.f32 %v726
        %v743 = vcvt.s32.f32 %v727
        %v744 = vld [vmem:[%s346] sm:$0xff]
        %v745 = vld [vmem:[%s346 + $0x8] sm:$0xff]
        %v746 = vld [vmem:[%s346 + $0x10] sm:$0xff]
        %v747 = vld [vmem:[%s346 + $0x18] sm:$0xff]
        %v748 = vld [vmem:[%s346 + $0x20] sm:$0xff]
        %v749 = vld [vmem:[%s346 + $0x28] sm:$0xff]
        %v750 = vld [vmem:[%s346 + $0x30] sm:$0xff]
        %v751 = vld [vmem:[%s346 + $0x38] sm:$0xff]
        %v752 = vld [vmem:[%s346 + $0x40] sm:$0xff]
        %v753 = vld [vmem:[%s346 + $0x48] sm:$0xff]
        %v754 = vld [vmem:[%s346 + $0x50] sm:$0xff]
        %v755 = vld [vmem:[%s346 + $0x58] sm:$0xff]
        %v756 = vld [vmem:[%s346 + $0x60] sm:$0xff]
        %v757 = vld [vmem:[%s346 + $0x68] sm:$0xff]
        %v758 = vld [vmem:[%s346 + $0x70] sm:$0xff]
        %v759 = vld [vmem:[%s346 + $0x78] sm:$0xff]
        %760 = vset.pattern.permute.xlu0 0
        %761 = vperm.xlu0 %760, %v744
        %v762 = vpop.permute.xlu0 %761
        %763 = vset.pattern.permute.xlu0 0
        %764 = vperm.xlu0 %763, %v745
        %v765 = vpop.permute.xlu0 %764
        %766 = vset.pattern.permute.xlu0 0
        %767 = vperm.xlu0 %766, %v746
        %v768 = vpop.permute.xlu0 %767
        %769 = vset.pattern.permute.xlu0 0
        %770 = vperm.xlu0 %769, %v747
        %v771 = vpop.permute.xlu0 %770
        %772 = vset.pattern.permute.xlu0 0
        %773 = vperm.xlu0 %772, %v748
        %v774 = vpop.permute.xlu0 %773
        %775 = vset.pattern.permute.xlu0 0
        %776 = vperm.xlu0 %775, %v749
        %v777 = vpop.permute.xlu0 %776
        %778 = vset.pattern.permute.xlu0 0
        %779 = vperm.xlu0 %778, %v750
        %v780 = vpop.permute.xlu0 %779
        %781 = vset.pattern.permute.xlu0 0
        %782 = vperm.xlu0 %781, %v751
        %v783 = vpop.permute.xlu0 %782
        %784 = vset.pattern.permute.xlu0 0
        %785 = vperm.xlu0 %784, %v752
        %v786 = vpop.permute.xlu0 %785
        %787 = vset.pattern.permute.xlu0 0
        %788 = vperm.xlu0 %787, %v753
        %v789 = vpop.permute.xlu0 %788
        %790 = vset.pattern.permute.xlu0 0
        %791 = vperm.xlu0 %790, %v754
        %v792 = vpop.permute.xlu0 %791
        %793 = vset.pattern.permute.xlu0 0
        %794 = vperm.xlu0 %793, %v755
        %v795 = vpop.permute.xlu0 %794
        %796 = vset.pattern.permute.xlu0 0
        %797 = vperm.xlu0 %796, %v756
        %v798 = vpop.permute.xlu0 %797
        %799 = vset.pattern.permute.xlu0 0
        %800 = vperm.xlu0 %799, %v757
        %v801 = vpop.permute.xlu0 %800
        %802 = vset.pattern.permute.xlu0 0
        %803 = vperm.xlu0 %802, %v758
        %v804 = vpop.permute.xlu0 %803
        %805 = vset.pattern.permute.xlu0 0
        %806 = vperm.xlu0 %805, %v759
        %v807 = vpop.permute.xlu0 %806
        %vm808 = vcmp.eq.s32.totalorder %v762, %v631
        %vm809 = vcmp.eq.s32.totalorder %v765, %v631
        %vm810 = vcmp.eq.s32.totalorder %v768, %v631
        %vm811 = vcmp.eq.s32.totalorder %v771, %v631
        %vm812 = vcmp.eq.s32.totalorder %v774, %v631
        %vm813 = vcmp.eq.s32.totalorder %v777, %v631
        %vm814 = vcmp.eq.s32.totalorder %v780, %v631
        %vm815 = vcmp.eq.s32.totalorder %v783, %v631
        %vm816 = vcmp.eq.s32.totalorder %v786, %v631
        %vm817 = vcmp.eq.s32.totalorder %v789, %v631
        %vm818 = vcmp.eq.s32.totalorder %v792, %v631
        %vm819 = vcmp.eq.s32.totalorder %v795, %v631
        %vm820 = vcmp.eq.s32.totalorder %v798, %v631
        %vm821 = vcmp.eq.s32.totalorder %v801, %v631
        %vm822 = vcmp.eq.s32.totalorder %v804, %v631
        %vm823 = vcmp.eq.s32.totalorder %v807, %v631
        %v824 = vsel %vm808, 1, 0
        %v825 = vsel %vm809, 1, 0
        %v826 = vsel %vm810, 1, 0
        %v827 = vsel %vm811, 1, 0
        %v828 = vsel %vm812, 1, 0
        %v829 = vsel %vm813, 1, 0
        %v830 = vsel %vm814, 1, 0
        %v831 = vsel %vm815, 1, 0
        %v832 = vsel %vm816, 1, 0
        %v833 = vsel %vm817, 1, 0
        %v834 = vsel %vm818, 1, 0
        %v835 = vsel %vm819, 1, 0
        %v836 = vsel %vm820, 1, 0
        %v837 = vsel %vm821, 1, 0
        %v838 = vsel %vm822, 1, 0
        %v839 = vsel %vm823, 1, 0
        %v840 = vcvt.s32.f32 %v824
        %v841 = vcvt.s32.f32 %v825
        %v842 = vcvt.s32.f32 %v826
        %v843 = vcvt.s32.f32 %v827
        %v844 = vcvt.s32.f32 %v828
        %v845 = vcvt.s32.f32 %v829
        %v846 = vcvt.s32.f32 %v830
        %v847 = vcvt.s32.f32 %v831
        %v848 = vcvt.s32.f32 %v832
        %v849 = vcvt.s32.f32 %v833
        %v850 = vcvt.s32.f32 %v834
        %v851 = vcvt.s32.f32 %v835
        %v852 = vcvt.s32.f32 %v836
        %v853 = vcvt.s32.f32 %v837
        %v854 = vcvt.s32.f32 %v838
        %v855 = vcvt.s32.f32 %v839
        %v856 = vld [vmem:[%s352] sm:$0xff]
        %v857 = vld [vmem:[%s352 + $0x8] sm:$0xff]
        %v858 = vld [vmem:[%s352 + $0x10] sm:$0xff]
        %v859 = vld [vmem:[%s352 + $0x18] sm:$0xff]
        %v860 = vld [vmem:[%s352 + $0x20] sm:$0xff]
        %v861 = vld [vmem:[%s352 + $0x28] sm:$0xff]
        %v862 = vld [vmem:[%s352 + $0x30] sm:$0xff]
        %v863 = vld [vmem:[%s352 + $0x38] sm:$0xff]
        %v864 = vld [vmem:[%s352 + $0x40] sm:$0xff]
        %v865 = vld [vmem:[%s352 + $0x48] sm:$0xff]
        %v866 = vld [vmem:[%s352 + $0x50] sm:$0xff]
        %v867 = vld [vmem:[%s352 + $0x58] sm:$0xff]
        %v868 = vld [vmem:[%s352 + $0x60] sm:$0xff]
        %v869 = vld [vmem:[%s352 + $0x68] sm:$0xff]
        %v870 = vld [vmem:[%s352 + $0x70] sm:$0xff]
        %v871 = vld [vmem:[%s352 + $0x78] sm:$0xff]
        %872 = vset.pattern.permute.xlu0 0
        %873 = vperm.xlu0 %872, %v856
        %v874 = vpop.permute.xlu0 %873
        %875 = vset.pattern.permute.xlu0 0
        %876 = vperm.xlu0 %875, %v857
        %v877 = vpop.permute.xlu0 %876
        %878 = vset.pattern.permute.xlu0 0
        %879 = vperm.xlu0 %878, %v858
        %v880 = vpop.permute.xlu0 %879
        %881 = vset.pattern.permute.xlu0 0
        %882 = vperm.xlu0 %881, %v859
        %v883 = vpop.permute.xlu0 %882
        %884 = vset.pattern.permute.xlu0 0
        %885 = vperm.xlu0 %884, %v860
        %v886 = vpop.permute.xlu0 %885
        %887 = vset.pattern.permute.xlu0 0
        %888 = vperm.xlu0 %887, %v861
        %v889 = vpop.permute.xlu0 %888
        %890 = vset.pattern.permute.xlu0 0
        %891 = vperm.xlu0 %890, %v862
        %v892 = vpop.permute.xlu0 %891
        %893 = vset.pattern.permute.xlu0 0
        %894 = vperm.xlu0 %893, %v863
        %v895 = vpop.permute.xlu0 %894
        %896 = vset.pattern.permute.xlu0 0
        %897 = vperm.xlu0 %896, %v864
        %v898 = vpop.permute.xlu0 %897
        %899 = vset.pattern.permute.xlu0 0
        %900 = vperm.xlu0 %899, %v865
        %v901 = vpop.permute.xlu0 %900
        %902 = vset.pattern.permute.xlu0 0
        %903 = vperm.xlu0 %902, %v866
        %v904 = vpop.permute.xlu0 %903
        %905 = vset.pattern.permute.xlu0 0
        %906 = vperm.xlu0 %905, %v867
        %v907 = vpop.permute.xlu0 %906
        %908 = vset.pattern.permute.xlu0 0
        %909 = vperm.xlu0 %908, %v868
        %v910 = vpop.permute.xlu0 %909
        %911 = vset.pattern.permute.xlu0 0
        %912 = vperm.xlu0 %911, %v869
        %v913 = vpop.permute.xlu0 %912
        %914 = vset.pattern.permute.xlu0 0
        %915 = vperm.xlu0 %914, %v870
        %v916 = vpop.permute.xlu0 %915
        %917 = vset.pattern.permute.xlu0 0
        %918 = vperm.xlu0 %917, %v871
        %v919 = vpop.permute.xlu0 %918
        %vm920 = vcmp.eq.s32.totalorder %v874, %v631
        %vm921 = vcmp.eq.s32.totalorder %v877, %v631
        %vm922 = vcmp.eq.s32.totalorder %v880, %v631
        %vm923 = vcmp.eq.s32.totalorder %v883, %v631
        %vm924 = vcmp.eq.s32.totalorder %v886, %v631
        %vm925 = vcmp.eq.s32.totalorder %v889, %v631
        %vm926 = vcmp.eq.s32.totalorder %v892, %v631
        %vm927 = vcmp.eq.s32.totalorder %v895, %v631
        %vm928 = vcmp.eq.s32.totalorder %v898, %v631
        %vm929 = vcmp.eq.s32.totalorder %v901, %v631
        %vm930 = vcmp.eq.s32.totalorder %v904, %v631
        %vm931 = vcmp.eq.s32.totalorder %v907, %v631
        %vm932 = vcmp.eq.s32.totalorder %v910, %v631
        %vm933 = vcmp.eq.s32.totalorder %v913, %v631
        %vm934 = vcmp.eq.s32.totalorder %v916, %v631
        %vm935 = vcmp.eq.s32.totalorder %v919, %v631
        %v936 = vsel %vm920, 1, 0
        %v937 = vsel %vm921, 1, 0
        %v938 = vsel %vm922, 1, 0
        %v939 = vsel %vm923, 1, 0
        %v940 = vsel %vm924, 1, 0
        %v941 = vsel %vm925, 1, 0
        %v942 = vsel %vm926, 1, 0
        %v943 = vsel %vm927, 1, 0
        %v944 = vsel %vm928, 1, 0
        %v945 = vsel %vm929, 1, 0
        %v946 = vsel %vm930, 1, 0
        %v947 = vsel %vm931, 1, 0
        %v948 = vsel %vm932, 1, 0
        %v949 = vsel %vm933, 1, 0
        %v950 = vsel %vm934, 1, 0
        %v951 = vsel %vm935, 1, 0
        %v952 = vcvt.s32.f32 %v936
        %v953 = vcvt.s32.f32 %v937
        %v954 = vcvt.s32.f32 %v938
        %v955 = vcvt.s32.f32 %v939
        %v956 = vcvt.s32.f32 %v940
        %v957 = vcvt.s32.f32 %v941
        %v958 = vcvt.s32.f32 %v942
        %v959 = vcvt.s32.f32 %v943
        %v960 = vcvt.s32.f32 %v944
        %v961 = vcvt.s32.f32 %v945
        %v962 = vcvt.s32.f32 %v946
        %v963 = vcvt.s32.f32 %v947
        %v964 = vcvt.s32.f32 %v948
        %v965 = vcvt.s32.f32 %v949
        %v966 = vcvt.s32.f32 %v950
        %v967 = vcvt.s32.f32 %v951
        %v968 = vld [vmem:[%s358] sm:$0xff]
        %v969 = vld [vmem:[%s358 + $0x8] sm:$0xff]
        %v970 = vld [vmem:[%s358 + $0x10] sm:$0xff]
        %v971 = vld [vmem:[%s358 + $0x18] sm:$0xff]
        %v972 = vld [vmem:[%s358 + $0x20] sm:$0xff]
        %v973 = vld [vmem:[%s358 + $0x28] sm:$0xff]
        %v974 = vld [vmem:[%s358 + $0x30] sm:$0xff]
        %v975 = vld [vmem:[%s358 + $0x38] sm:$0xff]
        %v976 = vld [vmem:[%s358 + $0x40] sm:$0xff]
        %v977 = vld [vmem:[%s358 + $0x48] sm:$0xff]
        %v978 = vld [vmem:[%s358 + $0x50] sm:$0xff]
        %v979 = vld [vmem:[%s358 + $0x58] sm:$0xff]
        %v980 = vld [vmem:[%s358 + $0x60] sm:$0xff]
        %v981 = vld [vmem:[%s358 + $0x68] sm:$0xff]
        %v982 = vld [vmem:[%s358 + $0x70] sm:$0xff]
        %v983 = vld [vmem:[%s358 + $0x78] sm:$0xff]
        %984 = vset.pattern.permute.xlu0 0
        %985 = vperm.xlu0 %984, %v968
        %v986 = vpop.permute.xlu0 %985
        %987 = vset.pattern.permute.xlu0 0
        %988 = vperm.xlu0 %987, %v969
        %v989 = vpop.permute.xlu0 %988
        %990 = vset.pattern.permute.xlu0 0
        %991 = vperm.xlu0 %990, %v970
        %v992 = vpop.permute.xlu0 %991
        %993 = vset.pattern.permute.xlu0 0
        %994 = vperm.xlu0 %993, %v971
        %v995 = vpop.permute.xlu0 %994
        %996 = vset.pattern.permute.xlu0 0
        %997 = vperm.xlu0 %996, %v972
        %v998 = vpop.permute.xlu0 %997
        %999 = vset.pattern.permute.xlu0 0
        %1000 = vperm.xlu0 %999, %v973
        %v1001 = vpop.permute.xlu0 %1000
        %1002 = vset.pattern.permute.xlu0 0
        %1003 = vperm.xlu0 %1002, %v974
        %v1004 = vpop.permute.xlu0 %1003
        %1005 = vset.pattern.permute.xlu0 0
        %1006 = vperm.xlu0 %1005, %v975
        %v1007 = vpop.permute.xlu0 %1006
        %1008 = vset.pattern.permute.xlu0 0
        %1009 = vperm.xlu0 %1008, %v976
        %v1010 = vpop.permute.xlu0 %1009
        %1011 = vset.pattern.permute.xlu0 0
        %1012 = vperm.xlu0 %1011, %v977
        %v1013 = vpop.permute.xlu0 %1012
        %1014 = vset.pattern.permute.xlu0 0
        %1015 = vperm.xlu0 %1014, %v978
        %v1016 = vpop.permute.xlu0 %1015
        %1017 = vset.pattern.permute.xlu0 0
        %1018 = vperm.xlu0 %1017, %v979
        %v1019 = vpop.permute.xlu0 %1018
        %1020 = vset.pattern.permute.xlu0 0
        %1021 = vperm.xlu0 %1020, %v980
        %v1022 = vpop.permute.xlu0 %1021
        %1023 = vset.pattern.permute.xlu0 0
        %1024 = vperm.xlu0 %1023, %v981
        %v1025 = vpop.permute.xlu0 %1024
        %1026 = vset.pattern.permute.xlu0 0
        %1027 = vperm.xlu0 %1026, %v982
        %v1028 = vpop.permute.xlu0 %1027
        %1029 = vset.pattern.permute.xlu0 0
        %1030 = vperm.xlu0 %1029, %v983
        %v1031 = vpop.permute.xlu0 %1030
        %vm1032 = vcmp.eq.s32.totalorder %v986, %v631
        %vm1033 = vcmp.eq.s32.totalorder %v989, %v631
        %vm1034 = vcmp.eq.s32.totalorder %v992, %v631
        %vm1035 = vcmp.eq.s32.totalorder %v995, %v631
        %vm1036 = vcmp.eq.s32.totalorder %v998, %v631
        %vm1037 = vcmp.eq.s32.totalorder %v1001, %v631
        %vm1038 = vcmp.eq.s32.totalorder %v1004, %v631
        %vm1039 = vcmp.eq.s32.totalorder %v1007, %v631
        %vm1040 = vcmp.eq.s32.totalorder %v1010, %v631
        %vm1041 = vcmp.eq.s32.totalorder %v1013, %v631
        %vm1042 = vcmp.eq.s32.totalorder %v1016, %v631
        %vm1043 = vcmp.eq.s32.totalorder %v1019, %v631
        %vm1044 = vcmp.eq.s32.totalorder %v1022, %v631
        %vm1045 = vcmp.eq.s32.totalorder %v1025, %v631
        %vm1046 = vcmp.eq.s32.totalorder %v1028, %v631
        %vm1047 = vcmp.eq.s32.totalorder %v1031, %v631
        %v1048 = vsel %vm1032, 1, 0
        %v1049 = vsel %vm1033, 1, 0
        %v1050 = vsel %vm1034, 1, 0
        %v1051 = vsel %vm1035, 1, 0
        %v1052 = vsel %vm1036, 1, 0
        %v1053 = vsel %vm1037, 1, 0
        %v1054 = vsel %vm1038, 1, 0
        %v1055 = vsel %vm1039, 1, 0
        %v1056 = vsel %vm1040, 1, 0
        %v1057 = vsel %vm1041, 1, 0
        %v1058 = vsel %vm1042, 1, 0
        %v1059 = vsel %vm1043, 1, 0
        %v1060 = vsel %vm1044, 1, 0
        %v1061 = vsel %vm1045, 1, 0
        %v1062 = vsel %vm1046, 1, 0
        %v1063 = vsel %vm1047, 1, 0
        %v1064 = vcvt.s32.f32 %v1048
        %v1065 = vcvt.s32.f32 %v1049
        %v1066 = vcvt.s32.f32 %v1050
        %v1067 = vcvt.s32.f32 %v1051
        %v1068 = vcvt.s32.f32 %v1052
        %v1069 = vcvt.s32.f32 %v1053
        %v1070 = vcvt.s32.f32 %v1054
        %v1071 = vcvt.s32.f32 %v1055
        %v1072 = vcvt.s32.f32 %v1056
        %v1073 = vcvt.s32.f32 %v1057
        %v1074 = vcvt.s32.f32 %v1058
        %v1075 = vcvt.s32.f32 %v1059
        %v1076 = vcvt.s32.f32 %v1060
        %v1077 = vcvt.s32.f32 %v1061
        %v1078 = vcvt.s32.f32 %v1062
        %v1079 = vcvt.s32.f32 %v1063
        %v1080 = vld [vmem:[#allocation2] sm:$0xff]
        %v1081 = vld [vmem:[#allocation2 + $0x8] sm:$0xff]
        %v1082 = vld [vmem:[#allocation2 + $0x10] sm:$0xff]
        %v1083 = vld [vmem:[#allocation2 + $0x18] sm:$0xff]
        %vm1084 = vcmask 261120
        %v1086 = vsel %vm1084, %v728, 0
        %v1089 = vsel %vm1084, %v729, 0
        %v1092 = vsel %vm1084, %v730, 0
        %v1095 = vsel %vm1084, %v731, 0
        %v1098 = vsel %vm1084, %v732, 0
        %v1101 = vsel %vm1084, %v733, 0
        %v1104 = vsel %vm1084, %v734, 0
        %v1107 = vsel %vm1084, %v735, 0
        %v1110 = vsel %vm1084, %v736, 0
        %v1113 = vsel %vm1084, %v737, 0
        %v1116 = vsel %vm1084, %v738, 0
        %v1119 = vsel %vm1084, %v739, 0
        %v1122 = vsel %vm1084, %v740, 0
        %v1125 = vsel %vm1084, %v741, 0
        %v1128 = vsel %vm1084, %v742, 0
        %v1131 = vsel %vm1084, %v743, 0
        %1133 = vmatprep.subr.mxu0 0.0
        %1134 = vmatpush1.msra.mxu0 %v1080
        %1135 = vmatprep.subr.mxu0 0.0
        %1136 = vmatpush1.msra.mxu0 %v1081
        %1137 = vmatprep.subr.mxu0 0.0
        %1138 = vmatpush1.msra.mxu0 %v1082
        %1139 = vmatprep.subr.mxu0 0.0
        %1140 = vmatpush1.msra.mxu0 %v1083
        %1141 = vmatprep.subr.mxu0 0.0
        %1142 = vmatpush1.msra.mxu0 0.0
        %1143 = vmatprep.subr.mxu0 0.0
        %1144 = vmatpush1.msra.mxu0 0.0
        %1145 = vmatprep.subr.mxu0 0.0
        %1146 = vmatpush1.msra.mxu0 0.0
        %1147 = vmatprep.subr.mxu0 0.0
        %1148 = vmatpush1.msra.mxu0 0.0
        %1149 = vmatprep.subr.mxu0 0.0
        %1150 = vmatpush1.msra.mxu0 0.0
        %1151 = vmatprep.subr.mxu0 0.0
        %1152 = vmatpush1.msra.mxu0 0.0
        %1153 = vmatprep.subr.mxu0 0.0
        %1154 = vmatpush1.msra.mxu0 0.0
        %1155 = vmatprep.subr.mxu0 0.0
        %1156 = vmatpush1.msra.mxu0 0.0
        %1157 = vmatprep.subr.mxu0 0.0
        %1158 = vmatpush1.msra.mxu0 0.0
        %1159 = vmatprep.subr.mxu0 0.0
        %1160 = vmatpush1.msra.mxu0 0.0
        %1161 = vmatprep.subr.mxu0 0.0
        %1162 = vmatpush1.msra.mxu0 0.0
        %1163 = vmatprep.subr.mxu0 0.0
        %1164 = vmatpush1.msra.mxu0 0.0
        %1165 = vmatprep.subr.mxu0 0.0
        %1166 = vmatpush1.msra.mxu0 0.0
        %1167 = vmatprep.subr.mxu0 0.0
        %1168 = vmatpush1.msra.mxu0 0.0
        %1169 = vmatprep.subr.mxu0 0.0
        %1170 = vmatpush1.msra.mxu0 0.0
        %1171 = vmatprep.subr.mxu0 0.0
        %1172 = vmatpush1.msra.mxu0 0.0
        %1173 = vmatprep.subr.mxu0 0.0
        %1174 = vmatpush1.msra.mxu0 0.0
        %1175 = vmatprep.subr.mxu0 0.0
        %1176 = vmatpush1.msra.mxu0 0.0
        %1177 = vmatprep.subr.mxu0 0.0
        %1178 = vmatpush1.msra.mxu0 0.0
        %1179 = vmatprep.subr.mxu0 0.0
        %1180 = vmatpush1.msra.mxu0 0.0
        %1181 = vmatprep.subr.mxu0 0.0
        %1182 = vmatpush1.msra.mxu0 0.0
        %1183 = vmatprep.subr.mxu0 0.0
        %1184 = vmatpush1.msra.mxu0 0.0
        %1185 = vmatprep.subr.mxu0 0.0
        %1186 = vmatpush1.msra.mxu0 0.0
        %1187 = vmatprep.subr.mxu0 0.0
        %1188 = vmatpush1.msra.mxu0 0.0
        %1189 = vmatprep.subr.mxu0 0.0
        %1190 = vmatpush1.msra.mxu0 0.0
        %1191 = vmatprep.subr.mxu0 0.0
        %1192 = vmatpush1.msra.mxu0 0.0
        %1193 = vmatprep.subr.mxu0 0.0
        %1194 = vmatpush1.msra.mxu0 0.0
        %1195 = vmatprep.subr.mxu0 0.0
        %1196 = vmatpush1.msra.mxu0 0.0
        %1197 = vmatprep.mubr.f32.mxu0 0.0
        %1198 = vmatmul.mubr.f32.gmra.mrb[0].mxu0 %v1086
        %v1199 = vpop.f32.mrb[0].mxu0
        %v1200 = vadd.f32 0.0, %v1199
        %v1201 = vpop.f32.mrb[0].mxu0
        %1202 = vmatprep.mubr.f32.mxu0 0.0
        %1203 = vmatmul.mubr.f32.gmra.mrb[0].mxu0 %v1089
        %v1204 = vpop.f32.mrb[0].mxu0
        %v1205 = vadd.f32 0.0, %v1204
        %v1206 = vpop.f32.mrb[0].mxu0
        %1207 = vmatprep.mubr.f32.mxu0 0.0
        %1208 = vmatmul.mubr.f32.gmra.mrb[0].mxu0 %v1092
        %v1209 = vpop.f32.mrb[0].mxu0
        %v1210 = vadd.f32 0.0, %v1209
        %v1211 = vpop.f32.mrb[0].mxu0
        %1212 = vmatprep.mubr.f32.mxu0 0.0
        %1213 = vmatmul.mubr.f32.gmra.mrb[0].mxu0 %v1095
        %v1214 = vpop.f32.mrb[0].mxu0
        %v1215 = vadd.f32 0.0, %v1214
        %v1216 = vpop.f32.mrb[0].mxu0
        %1217 = vmatprep.mubr.f32.mxu0 0.0
        %1218 = vmatmul.mubr.f32.gmra.mrb[0].mxu0 %v1098
        %v1219 = vpop.f32.mrb[0].mxu0
        %v1220 = vadd.f32 0.0, %v1219
        %v1221 = vpop.f32.mrb[0].mxu0
        %1222 = vmatprep.mubr.f32.mxu0 0.0
        %1223 = vmatmul.mubr.f32.gmra.mrb[0].mxu0 %v1101
        %v1224 = vpop.f32.mrb[0].mxu0
        %v1225 = vadd.f32 0.0, %v1224
        %v1226 = vpop.f32.mrb[0].mxu0
        %1227 = vmatprep.mubr.f32.mxu0 0.0
        %1228 = vmatmul.mubr.f32.gmra.mrb[0].mxu0 %v1104
        %v1229 = vpop.f32.mrb[0].mxu0
        %v1230 = vadd.f32 0.0, %v1229
        %v1231 = vpop.f32.mrb[0].mxu0
        %1232 = vmatprep.mubr.f32.mxu0 0.0
        %1233 = vmatmul.mubr.f32.gmra.mrb[0].mxu0 %v1107
        %v1234 = vpop.f32.mrb[0].mxu0
        %v1235 = vadd.f32 0.0, %v1234
        %v1236 = vpop.f32.mrb[0].mxu0
        %1237 = vmatprep.mubr.f32.mxu0 0.0
        %1238 = vmatmul.mubr.f32.gmra.mrb[0].mxu0 %v1110
        %v1239 = vpop.f32.mrb[0].mxu0
        %v1240 = vadd.f32 0.0, %v1239
        %v1241 = vpop.f32.mrb[0].mxu0
        %1242 = vmatprep.mubr.f32.mxu0 0.0
        %1243 = vmatmul.mubr.f32.gmra.mrb[0].mxu0 %v1113
        %v1244 = vpop.f32.mrb[0].mxu0
        %v1245 = vadd.f32 0.0, %v1244
        %v1246 = vpop.f32.mrb[0].mxu0
        %1247 = vmatprep.mubr.f32.mxu0 0.0
        %1248 = vmatmul.mubr.f32.gmra.mrb[0].mxu0 %v1116
        %v1249 = vpop.f32.mrb[0].mxu0
        %v1250 = vadd.f32 0.0, %v1249
        %v1251 = vpop.f32.mrb[0].mxu0
        %1252 = vmatprep.mubr.f32.mxu0 0.0
        %1253 = vmatmul.mubr.f32.gmra.mrb[0].mxu0 %v1119
        %v1254 = vpop.f32.mrb[0].mxu0
        %v1255 = vadd.f32 0.0, %v1254
        %v1256 = vpop.f32.mrb[0].mxu0
        %1257 = vmatprep.mubr.f32.mxu0 0.0
        %1258 = vmatmul.mubr.f32.gmra.mrb[0].mxu0 %v1122
        %v1259 = vpop.f32.mrb[0].mxu0
        %v1260 = vadd.f32 0.0, %v1259
        %v1261 = vpop.f32.mrb[0].mxu0
        %1262 = vmatprep.mubr.f32.mxu0 0.0
        %1263 = vmatmul.mubr.f32.gmra.mrb[0].mxu0 %v1125
        %v1264 = vpop.f32.mrb[0].mxu0
        %v1265 = vadd.f32 0.0, %v1264
        %v1266 = vpop.f32.mrb[0].mxu0
        %1267 = vmatprep.mubr.f32.mxu0 0.0
        %1268 = vmatmul.mubr.f32.gmra.mrb[0].mxu0 %v1128
        %v1269 = vpop.f32.mrb[0].mxu0
        %v1270 = vadd.f32 0.0, %v1269
        %v1271 = vpop.f32.mrb[0].mxu0
        %1272 = vmatprep.mubr.f32.mxu0 0.0
        %1273 = vmatmul.mubr.f32.gmra.mrb[0].mxu0 %v1131
        %v1274 = vpop.f32.mrb[0].mxu0
        %v1275 = vadd.f32 0.0, %v1274
        %v1276 = vpop.f32.mrb[0].mxu0
        %1277 = vdwg.mxu0
        %v1278 = vmul.f32 %v1200, %v840
        %v1279 = vmul.f32 %v1205, %v841
        %v1280 = vmul.f32 %v1210, %v842
        %v1281 = vmul.f32 %v1215, %v843
        %v1282 = vmul.f32 %v1220, %v844
        %v1283 = vmul.f32 %v1225, %v845
        %v1284 = vmul.f32 %v1230, %v846
        %v1285 = vmul.f32 %v1235, %v847
        %v1286 = vmul.f32 %v1240, %v848
        %v1287 = vmul.f32 %v1245, %v849
        %v1288 = vmul.f32 %v1250, %v850
        %v1289 = vmul.f32 %v1255, %v851
        %v1290 = vmul.f32 %v1260, %v852
        %v1291 = vmul.f32 %v1265, %v853
        %v1292 = vmul.f32 %v1270, %v854
        %v1293 = vmul.f32 %v1275, %v855
        %vm1294 = vcmask 130048
        %v1295 = vsel %vm1294, %v1278, 0.0
        %1296 = vadd.xlane.f32.xlu0 %v1295
        %v1297 = vpop.xlane.xlu0 %1296
        %v1298 = vsel %vm1294, %v1279, 0.0
        %1299 = vadd.xlane.f32.xlu0 %v1298
        %v1300 = vpop.xlane.xlu0 %1299
        %v1301 = vsel %vm1294, %v1280, 0.0
        %1302 = vadd.xlane.f32.xlu0 %v1301
        %v1303 = vpop.xlane.xlu0 %1302
        %v1304 = vsel %vm1294, %v1281, 0.0
        %1305 = vadd.xlane.f32.xlu0 %v1304
        %v1306 = vpop.xlane.xlu0 %1305
        %v1307 = vsel %vm1294, %v1282, 0.0
        %1308 = vadd.xlane.f32.xlu0 %v1307
        %v1309 = vpop.xlane.xlu0 %1308
        %v1310 = vsel %vm1294, %v1283, 0.0
        %1311 = vadd.xlane.f32.xlu0 %v1310
        %v1312 = vpop.xlane.xlu0 %1311
        %v1313 = vsel %vm1294, %v1284, 0.0
        %1314 = vadd.xlane.f32.xlu0 %v1313
        %v1315 = vpop.xlane.xlu0 %1314
        %v1316 = vsel %vm1294, %v1285, 0.0
        %1317 = vadd.xlane.f32.xlu0 %v1316
        %v1318 = vpop.xlane.xlu0 %1317
        %v1319 = vsel %vm1294, %v1286, 0.0
        %1320 = vadd.xlane.f32.xlu0 %v1319
        %v1321 = vpop.xlane.xlu0 %1320
        %v1322 = vsel %vm1294, %v1287, 0.0
        %1323 = vadd.xlane.f32.xlu0 %v1322
        %v1324 = vpop.xlane.xlu0 %1323
        %v1325 = vsel %vm1294, %v1288, 0.0
        %1326 = vadd.xlane.f32.xlu0 %v1325
        %v1327 = vpop.xlane.xlu0 %1326
        %v1328 = vsel %vm1294, %v1289, 0.0
        %1329 = vadd.xlane.f32.xlu0 %v1328
        %v1330 = vpop.xlane.xlu0 %1329
        %v1331 = vsel %vm1294, %v1290, 0.0
        %1332 = vadd.xlane.f32.xlu0 %v1331
        %v1333 = vpop.xlane.xlu0 %1332
        %v1334 = vsel %vm1294, %v1291, 0.0
        %1335 = vadd.xlane.f32.xlu0 %v1334
        %v1336 = vpop.xlane.xlu0 %1335
        %v1337 = vsel %vm1294, %v1292, 0.0
        %1338 = vadd.xlane.f32.xlu0 %v1337
        %v1339 = vpop.xlane.xlu0 %1338
        %v1340 = vsel %vm1294, %v1293, 0.0
        %1341 = vadd.xlane.f32.xlu0 %v1340
        %v1342 = vpop.xlane.xlu0 %1341
        %v1343 = vld [vmem:[#allocation3] sm:$0xff]
        %v1344 = vld [vmem:[#allocation3 + $0x8] sm:$0xff]
        %v1346 = vsel %vm1294, %v952, 0
        %v1349 = vsel %vm1294, %v953, 0
        %v1352 = vsel %vm1294, %v954, 0
        %v1355 = vsel %vm1294, %v955, 0
        %v1358 = vsel %vm1294, %v956, 0
        %v1361 = vsel %vm1294, %v957, 0
        %v1364 = vsel %vm1294, %v958, 0
        %v1367 = vsel %vm1294, %v959, 0
        %v1370 = vsel %vm1294, %v960, 0
        %v1373 = vsel %vm1294, %v961, 0
        %v1376 = vsel %vm1294, %v962, 0
        %v1379 = vsel %vm1294, %v963, 0
        %v1382 = vsel %vm1294, %v964, 0
        %v1385 = vsel %vm1294, %v965, 0
        %v1388 = vsel %vm1294, %v966, 0
        %v1391 = vsel %vm1294, %v967, 0
        %1393 = vmatprep.subr.mxu0 0.0
        %1394 = vmatpush1.msra.mxu0 %v1343
        %1395 = vmatprep.subr.mxu0 0.0
        %1396 = vmatpush1.msra.mxu0 %v1344
        %1397 = vmatprep.subr.mxu0 0.0
        %1398 = vmatpush1.msra.mxu0 0.0
        %1399 = vmatprep.subr.mxu0 0.0
        %1400 = vmatpush1.msra.mxu0 0.0
        %1401 = vmatprep.subr.mxu0 0.0
        %1402 = vmatpush1.msra.mxu0 0.0
        %1403 = vmatprep.subr.mxu0 0.0
        %1404 = vmatpush1.msra.mxu0 0.0
        %1405 = vmatprep.subr.mxu0 0.0
        %1406 = vmatpush1.msra.mxu0 0.0
        %1407 = vmatprep.subr.mxu0 0.0
        %1408 = vmatpush1.msra.mxu0 0.0
        %1409 = vmatprep.subr.mxu0 0.0
        %1410 = vmatpush1.msra.mxu0 0.0
        %1411 = vmatprep.subr.mxu0 0.0
        %1412 = vmatpush1.msra.mxu0 0.0
        %1413 = vmatprep.subr.mxu0 0.0
        %1414 = vmatpush1.msra.mxu0 0.0
        %1415 = vmatprep.subr.mxu0 0.0
        %1416 = vmatpush1.msra.mxu0 0.0
        %1417 = vmatprep.subr.mxu0 0.0
        %1418 = vmatpush1.msra.mxu0 0.0
        %1419 = vmatprep.subr.mxu0 0.0
        %1420 = vmatpush1.msra.mxu0 0.0
        %1421 = vmatprep.subr.mxu0 0.0
        %1422 = vmatpush1.msra.mxu0 0.0
        %1423 = vmatprep.subr.mxu0 0.0
        %1424 = vmatpush1.msra.mxu0 0.0
        %1425 = vmatprep.subr.mxu0 0.0
        %1426 = vmatpush1.msra.mxu0 0.0
        %1427 = vmatprep.subr.mxu0 0.0
        %1428 = vmatpush1.msra.mxu0 0.0
        %1429 = vmatprep.subr.mxu0 0.0
        %1430 = vmatpush1.msra.mxu0 0.0
        %1431 = vmatprep.subr.mxu0 0.0
        %1432 = vmatpush1.msra.mxu0 0.0
        %1433 = vmatprep.subr.mxu0 0.0
        %1434 = vmatpush1.msra.mxu0 0.0
        %1435 = vmatprep.subr.mxu0 0.0
        %1436 = vmatpush1.msra.mxu0 0.0
        %1437 = vmatprep.subr.mxu0 0.0
        %1438 = vmatpush1.msra.mxu0 0.0
        %1439 = vmatprep.subr.mxu0 0.0
        %1440 = vmatpush1.msra.mxu0 0.0
        %1441 = vmatprep.subr.mxu0 0.0
        %1442 = vmatpush1.msra.mxu0 0.0
        %1443 = vmatprep.subr.mxu0 0.0
        %1444 = vmatpush1.msra.mxu0 0.0
        %1445 = vmatprep.subr.mxu0 0.0
        %1446 = vmatpush1.msra.mxu0 0.0
        %1447 = vmatprep.subr.mxu0 0.0
        %1448 = vmatpush1.msra.mxu0 0.0
        %1449 = vmatprep.subr.mxu0 0.0
        %1450 = vmatpush1.msra.mxu0 0.0
        %1451 = vmatprep.subr.mxu0 0.0
        %1452 = vmatpush1.msra.mxu0 0.0
        %1453 = vmatprep.subr.mxu0 0.0
        %1454 = vmatpush1.msra.mxu0 0.0
        %1455 = vmatprep.subr.mxu0 0.0
        %1456 = vmatpush1.msra.mxu0 0.0
        %1457 = vmatprep.mubr.f32.mxu0 0.0
        %1458 = vmatmul.mubr.f32.gmra.mrb[0].mxu0 %v1346
        %v1459 = vpop.f32.mrb[0].mxu0
        %v1460 = vadd.f32 0.0, %v1459
        %v1461 = vpop.f32.mrb[0].mxu0
        %1462 = vmatprep.mubr.f32.mxu0 0.0
        %1463 = vmatmul.mubr.f32.gmra.mrb[0].mxu0 %v1349
        %v1464 = vpop.f32.mrb[0].mxu0
        %v1465 = vadd.f32 0.0, %v1464
        %v1466 = vpop.f32.mrb[0].mxu0
        %1467 = vmatprep.mubr.f32.mxu0 0.0
        %1468 = vmatmul.mubr.f32.gmra.mrb[0].mxu0 %v1352
        %v1469 = vpop.f32.mrb[0].mxu0
        %v1470 = vadd.f32 0.0, %v1469
        %v1471 = vpop.f32.mrb[0].mxu0
        %1472 = vmatprep.mubr.f32.mxu0 0.0
        %1473 = vmatmul.mubr.f32.gmra.mrb[0].mxu0 %v1355
        %v1474 = vpop.f32.mrb[0].mxu0
        %v1475 = vadd.f32 0.0, %v1474
        %v1476 = vpop.f32.mrb[0].mxu0
        %1477 = vmatprep.mubr.f32.mxu0 0.0
        %1478 = vmatmul.mubr.f32.gmra.mrb[0].mxu0 %v1358
        %v1479 = vpop.f32.mrb[0].mxu0
        %v1480 = vadd.f32 0.0, %v1479
        %v1481 = vpop.f32.mrb[0].mxu0
        %1482 = vmatprep.mubr.f32.mxu0 0.0
        %1483 = vmatmul.mubr.f32.gmra.mrb[0].mxu0 %v1361
        %v1484 = vpop.f32.mrb[0].mxu0
        %v1485 = vadd.f32 0.0, %v1484
        %v1486 = vpop.f32.mrb[0].mxu0
        %1487 = vmatprep.mubr.f32.mxu0 0.0
        %1488 = vmatmul.mubr.f32.gmra.mrb[0].mxu0 %v1364
        %v1489 = vpop.f32.mrb[0].mxu0
        %v1490 = vadd.f32 0.0, %v1489
        %v1491 = vpop.f32.mrb[0].mxu0
        %1492 = vmatprep.mubr.f32.mxu0 0.0
        %1493 = vmatmul.mubr.f32.gmra.mrb[0].mxu0 %v1367
        %v1494 = vpop.f32.mrb[0].mxu0
        %v1495 = vadd.f32 0.0, %v1494
        %v1496 = vpop.f32.mrb[0].mxu0
        %1497 = vmatprep.mubr.f32.mxu0 0.0
        %1498 = vmatmul.mubr.f32.gmra.mrb[0].mxu0 %v1370
        %v1499 = vpop.f32.mrb[0].mxu0
        %v1500 = vadd.f32 0.0, %v1499
        %v1501 = vpop.f32.mrb[0].mxu0
        %1502 = vmatprep.mubr.f32.mxu0 0.0
        %1503 = vmatmul.mubr.f32.gmra.mrb[0].mxu0 %v1373
        %v1504 = vpop.f32.mrb[0].mxu0
        %v1505 = vadd.f32 0.0, %v1504
        %v1506 = vpop.f32.mrb[0].mxu0
        %1507 = vmatprep.mubr.f32.mxu0 0.0
        %1508 = vmatmul.mubr.f32.gmra.mrb[0].mxu0 %v1376
        %v1509 = vpop.f32.mrb[0].mxu0
        %v1510 = vadd.f32 0.0, %v1509
        %v1511 = vpop.f32.mrb[0].mxu0
        %1512 = vmatprep.mubr.f32.mxu0 0.0
        %1513 = vmatmul.mubr.f32.gmra.mrb[0].mxu0 %v1379
        %v1514 = vpop.f32.mrb[0].mxu0
        %v1515 = vadd.f32 0.0, %v1514
        %v1516 = vpop.f32.mrb[0].mxu0
        %1517 = vmatprep.mubr.f32.mxu0 0.0
        %1518 = vmatmul.mubr.f32.gmra.mrb[0].mxu0 %v1382
        %v1519 = vpop.f32.mrb[0].mxu0
        %v1520 = vadd.f32 0.0, %v1519
        %v1521 = vpop.f32.mrb[0].mxu0
        %1522 = vmatprep.mubr.f32.mxu0 0.0
        %1523 = vmatmul.mubr.f32.gmra.mrb[0].mxu0 %v1385
        %v1524 = vpop.f32.mrb[0].mxu0
        %v1525 = vadd.f32 0.0, %v1524
        %v1526 = vpop.f32.mrb[0].mxu0
        %1527 = vmatprep.mubr.f32.mxu0 0.0
        %1528 = vmatmul.mubr.f32.gmra.mrb[0].mxu0 %v1388
        %v1529 = vpop.f32.mrb[0].mxu0
        %v1530 = vadd.f32 0.0, %v1529
        %v1531 = vpop.f32.mrb[0].mxu0
        %1532 = vmatprep.mubr.f32.mxu0 0.0
        %1533 = vmatmul.mubr.f32.gmra.mrb[0].mxu0 %v1391
        %v1534 = vpop.f32.mrb[0].mxu0
        %v1535 = vadd.f32 0.0, %v1534
        %v1536 = vpop.f32.mrb[0].mxu0
        %1537 = vdwg.mxu0
        %v1538 = vmul.f32 %v1460, %v1064
        %v1539 = vmul.f32 %v1465, %v1065
        %v1540 = vmul.f32 %v1470, %v1066
        %v1541 = vmul.f32 %v1475, %v1067
        %v1542 = vmul.f32 %v1480, %v1068
        %v1543 = vmul.f32 %v1485, %v1069
        %v1544 = vmul.f32 %v1490, %v1070
        %v1545 = vmul.f32 %v1495, %v1071
        %v1546 = vmul.f32 %v1500, %v1072
        %v1547 = vmul.f32 %v1505, %v1073
        %v1548 = vmul.f32 %v1510, %v1074
        %v1549 = vmul.f32 %v1515, %v1075
        %v1550 = vmul.f32 %v1520, %v1076
        %v1551 = vmul.f32 %v1525, %v1077
        %v1552 = vmul.f32 %v1530, %v1078
        %v1553 = vmul.f32 %v1535, %v1079
        %v1554 = vsel %vm1294, %v1538, 0.0
        %1555 = vadd.xlane.f32.xlu0 %v1554
        %v1556 = vpop.xlane.xlu0 %1555
        %v1557 = vsel %vm1294, %v1539, 0.0
        %1558 = vadd.xlane.f32.xlu0 %v1557
        %v1559 = vpop.xlane.xlu0 %1558
        %v1560 = vsel %vm1294, %v1540, 0.0
        %1561 = vadd.xlane.f32.xlu0 %v1560
        %v1562 = vpop.xlane.xlu0 %1561
        %v1563 = vsel %vm1294, %v1541, 0.0
        %1564 = vadd.xlane.f32.xlu0 %v1563
        %v1565 = vpop.xlane.xlu0 %1564
        %v1566 = vsel %vm1294, %v1542, 0.0
        %1567 = vadd.xlane.f32.xlu0 %v1566
        %v1568 = vpop.xlane.xlu0 %1567
        %v1569 = vsel %vm1294, %v1543, 0.0
        %1570 = vadd.xlane.f32.xlu0 %v1569
        %v1571 = vpop.xlane.xlu0 %1570
        %v1572 = vsel %vm1294, %v1544, 0.0
        %1573 = vadd.xlane.f32.xlu0 %v1572
        %v1574 = vpop.xlane.xlu0 %1573
        %v1575 = vsel %vm1294, %v1545, 0.0
        %1576 = vadd.xlane.f32.xlu0 %v1575
        %v1577 = vpop.xlane.xlu0 %1576
        %v1578 = vsel %vm1294, %v1546, 0.0
        %1579 = vadd.xlane.f32.xlu0 %v1578
        %v1580 = vpop.xlane.xlu0 %1579
        %v1581 = vsel %vm1294, %v1547, 0.0
        %1582 = vadd.xlane.f32.xlu0 %v1581
        %v1583 = vpop.xlane.xlu0 %1582
        %v1584 = vsel %vm1294, %v1548, 0.0
        %1585 = vadd.xlane.f32.xlu0 %v1584
        %v1586 = vpop.xlane.xlu0 %1585
        %v1587 = vsel %vm1294, %v1549, 0.0
        %1588 = vadd.xlane.f32.xlu0 %v1587
        %v1589 = vpop.xlane.xlu0 %1588
        %v1590 = vsel %vm1294, %v1550, 0.0
        %1591 = vadd.xlane.f32.xlu0 %v1590
        %v1592 = vpop.xlane.xlu0 %1591
        %v1593 = vsel %vm1294, %v1551, 0.0
        %1594 = vadd.xlane.f32.xlu0 %v1593
        %v1595 = vpop.xlane.xlu0 %1594
        %v1596 = vsel %vm1294, %v1552, 0.0
        %1597 = vadd.xlane.f32.xlu0 %v1596
        %v1598 = vpop.xlane.xlu0 %1597
        %v1599 = vsel %vm1294, %v1553, 0.0
        %1600 = vadd.xlane.f32.xlu0 %v1599
        %v1601 = vpop.xlane.xlu0 %1600
        %s1602 = smul.u32 %s20, 128
        %v1603 = vlaneseq
        %v1604 = vshrl.u32 %v1603, 7
        %v1605 = vadd.s32 %v1604, 8
        %v1606 = vadd.s32 %v1604, 16
        %v1607 = vadd.s32 %v1604, 24
        %v1608 = vadd.s32 %v1604, 32
        %v1609 = vadd.s32 %v1604, 40
        %v1610 = vadd.s32 %v1604, 48
        %v1611 = vadd.s32 %v1604, 56
        %v1612 = vadd.s32 %v1604, 64
        %v1613 = vadd.s32 %v1604, 72
        %v1614 = vadd.s32 %v1604, 80
        %v1615 = vadd.s32 %v1604, 88
        %v1616 = vadd.s32 %v1604, 96
        %v1617 = vadd.s32 %v1604, 104
        %v1618 = vadd.s32 %v1604, 112
        %v1619 = vadd.s32 %v1604, 120
        %v1620 = vstv %s1602
        %v1621 = vadd.s32 %v1620, %v1604
        %v1622 = vadd.s32 %v1620, %v1605
        %v1623 = vadd.s32 %v1620, %v1606
        %v1624 = vadd.s32 %v1620, %v1607
        %v1625 = vadd.s32 %v1620, %v1608
        %v1626 = vadd.s32 %v1620, %v1609
        %v1627 = vadd.s32 %v1620, %v1610
        %v1628 = vadd.s32 %v1620, %v1611
        %v1629 = vadd.s32 %v1620, %v1612
        %v1630 = vadd.s32 %v1620, %v1613
        %v1631 = vadd.s32 %v1620, %v1614
        %v1632 = vadd.s32 %v1620, %v1615
        %v1633 = vadd.s32 %v1620, %v1616
        %v1634 = vadd.s32 %v1620, %v1617
        %v1635 = vadd.s32 %v1620, %v1618
        %v1636 = vadd.s32 %v1620, %v1619
        %vm1637 = vcmp.lt.s32.totalorder %v1621, 240
        %vm1638 = vcmp.lt.s32.totalorder %v1622, 240
        %vm1639 = vcmp.lt.s32.totalorder %v1623, 240
        %vm1640 = vcmp.lt.s32.totalorder %v1624, 240
        %vm1641 = vcmp.lt.s32.totalorder %v1625, 240
        %vm1642 = vcmp.lt.s32.totalorder %v1626, 240
        %vm1643 = vcmp.lt.s32.totalorder %v1627, 240
        %vm1644 = vcmp.lt.s32.totalorder %v1628, 240
        %vm1645 = vcmp.lt.s32.totalorder %v1629, 240
        %vm1646 = vcmp.lt.s32.totalorder %v1630, 240
        %vm1647 = vcmp.lt.s32.totalorder %v1631, 240
        %vm1648 = vcmp.lt.s32.totalorder %v1632, 240
        %vm1649 = vcmp.lt.s32.totalorder %v1633, 240
        %vm1650 = vcmp.lt.s32.totalorder %v1634, 240
        %vm1651 = vcmp.lt.s32.totalorder %v1635, 240
        %vm1652 = vcmp.lt.s32.totalorder %v1636, 240
        %v1653 = vsel %vm1637, 1, 0
        %v1654 = vsel %vm1638, 1, 0
        %v1655 = vsel %vm1639, 1, 0
        %v1656 = vsel %vm1640, 1, 0
        %v1657 = vsel %vm1641, 1, 0
        %v1658 = vsel %vm1642, 1, 0
        %v1659 = vsel %vm1643, 1, 0
        %v1660 = vsel %vm1644, 1, 0
        %v1661 = vsel %vm1645, 1, 0
        %v1662 = vsel %vm1646, 1, 0
        %v1663 = vsel %vm1647, 1, 0
        %v1664 = vsel %vm1648, 1, 0
        %v1665 = vsel %vm1649, 1, 0
        %v1666 = vsel %vm1650, 1, 0
        %v1667 = vsel %vm1651, 1, 0
        %v1668 = vsel %vm1652, 1, 0
        %v1669 = vcvt.s32.f32 %v1653
        %v1670 = vcvt.s32.f32 %v1654
        %v1671 = vcvt.s32.f32 %v1655
        %v1672 = vcvt.s32.f32 %v1656
        %v1673 = vcvt.s32.f32 %v1657
        %v1674 = vcvt.s32.f32 %v1658
        %v1675 = vcvt.s32.f32 %v1659
        %v1676 = vcvt.s32.f32 %v1660
        %v1677 = vcvt.s32.f32 %v1661
        %v1678 = vcvt.s32.f32 %v1662
        %v1679 = vcvt.s32.f32 %v1663
        %v1680 = vcvt.s32.f32 %v1664
        %v1681 = vcvt.s32.f32 %v1665
        %v1682 = vcvt.s32.f32 %v1666
        %v1683 = vcvt.s32.f32 %v1667
        %v1684 = vcvt.s32.f32 %v1668
        %v1685 = vld [vmem:[#allocation4] sm:$0x1]
        %v1686 = vmul.f32 %v1556, %v1297
        %v1687 = vmul.f32 %v1559, %v1300
        %v1688 = vmul.f32 %v1562, %v1303
        %v1689 = vmul.f32 %v1565, %v1306
        %v1690 = vmul.f32 %v1568, %v1309
        %v1691 = vmul.f32 %v1571, %v1312
        %v1692 = vmul.f32 %v1574, %v1315
        %v1693 = vmul.f32 %v1577, %v1318
        %v1694 = vmul.f32 %v1580, %v1321
        %v1695 = vmul.f32 %v1583, %v1324
        %v1696 = vmul.f32 %v1586, %v1327
        %v1697 = vmul.f32 %v1589, %v1330
        %v1698 = vmul.f32 %v1592, %v1333
        %v1699 = vmul.f32 %v1595, %v1336
        %v1700 = vmul.f32 %v1598, %v1339
        %v1701 = vmul.f32 %v1601, %v1342
        %v1702 = vmul.f32 %v1686, %v1669
        %v1703 = vmul.f32 %v1687, %v1670
        %v1704 = vmul.f32 %v1688, %v1671
        %v1705 = vmul.f32 %v1689, %v1672
        %v1706 = vmul.f32 %v1690, %v1673
        %v1707 = vmul.f32 %v1691, %v1674
        %v1708 = vmul.f32 %v1692, %v1675
        %v1709 = vmul.f32 %v1693, %v1676
        %v1710 = vmul.f32 %v1694, %v1677
        %v1711 = vmul.f32 %v1695, %v1678
        %v1712 = vmul.f32 %v1696, %v1679
        %v1713 = vmul.f32 %v1697, %v1680
        %v1714 = vmul.f32 %v1698, %v1681
        %v1715 = vmul.f32 %v1699, %v1682
        %v1716 = vmul.f32 %v1700, %v1683
        %v1717 = vmul.f32 %v1701, %v1684
        %vm1718 = vcmask 7168
        %v1719 = vsel %vm1718, %v1702, 0.0
        %v1720 = vsel %vm1718, %v1703, 0.0
        %v1721 = vadd.f32 %v1719, %v1720
        %v1722 = vsel %vm1718, %v1704, 0.0
        %v1723 = vadd.f32 %v1721, %v1722
        %v1724 = vsel %vm1718, %v1705, 0.0
        %v1725 = vadd.f32 %v1723, %v1724
        %v1726 = vsel %vm1718, %v1706, 0.0
        %v1727 = vadd.f32 %v1725, %v1726
        %v1728 = vsel %vm1718, %v1707, 0.0
        %v1729 = vadd.f32 %v1727, %v1728
        %v1730 = vsel %vm1718, %v1708, 0.0
        %v1731 = vadd.f32 %v1729, %v1730
        %v1732 = vsel %vm1718, %v1709, 0.0
        %v1733 = vadd.f32 %v1731, %v1732
        %v1734 = vsel %vm1718, %v1710, 0.0
        %v1735 = vadd.f32 %v1733, %v1734
        %v1736 = vsel %vm1718, %v1711, 0.0
        %v1737 = vadd.f32 %v1735, %v1736
        %v1738 = vsel %vm1718, %v1712, 0.0
        %v1739 = vadd.f32 %v1737, %v1738
        %v1740 = vsel %vm1718, %v1713, 0.0
        %v1741 = vadd.f32 %v1739, %v1740
        %v1742 = vsel %vm1718, %v1714, 0.0
        %v1743 = vadd.f32 %v1741, %v1742
        %v1744 = vsel %vm1718, %v1715, 0.0
        %v1745 = vadd.f32 %v1743, %v1744
        %v1746 = vsel %vm1718, %v1716, 0.0
        %v1747 = vadd.f32 %v1745, %v1746
        %v1748 = vsel %vm1718, %v1717, 0.0
        %v1749 = vadd.f32 %v1747, %v1748
        %1750 = vadd.xlane.f32.xlu0 %v1749
        %v1751 = vpop.xlane.xlu0 %1750
        %v1752 = vrot.slane %v1751, 4
        %v1753 = vadd.f32 %v1751, %v1752
        %v1754 = vrot.slane %v1753, 2
        %v1755 = vadd.f32 %v1753, %v1754
        %v1756 = vrot.slane %v1755, 1
        %v1757 = vadd.f32 %v1755, %v1756
        %s1758 = vtos %v1757
        %v1759 = vstv %s1758
        %v1760 = vadd.f32 %v1685, %v1759
        %vm1761 = vcmask 0
        %1762 = vst.msk [vmem:[#allocation4] sm:$0x1] %vm1761, %v1760
        %p1763 = scmp.eq.s32.totalorder %s20, 1
        // Predicated region
        $region57: #{tpu_custom_call.1} parent=51 // pred_check
          %p1764 = pneg %p1763
        $region58: #{tpu_custom_call.1} parent=51 // pred_check_branch
          %1766 = sbr.rel (%p1764) target = $region60
        $region59: #{tpu_custom_call.1} parent=51 // pred_region
          %v1767 = vld [vmem:[#allocation4] sm:$0x1]
          %v1768 = vmul.f32 %v1767, 0.004166667
          %1769 = vst.msk [vmem:[#allocation4] sm:$0x1] %vm1761, %v1768
        $region60: #{tpu_custom_call.1} parent=51 // pred_fallthru
          _
        // Predicated region
        $region61: #{tpu_custom_call.1} parent=51 // pred_check
          %p1770 = pneg %p221
        $region62: #{tpu_custom_call.1} parent=51 // pred_check_branch
          %1772 = sbr.rel (%p1770) target = $region64
        $region63: #{tpu_custom_call.1} parent=51 // pred_region
          %s1774 = ssub.s32 16, 16
          %1775 = vsyncadd [#allocation5], %s1774
          %s1777 = sshll.u32 [#allocation4], 4
          %s1778 = int_to_ptr.vmem [resolvable:$true] %s1777
          %1780 = dma.vmem_to_hbm [thread:$0]  %s1778, 16, %s8, [#allocation5]
        $region64: #{tpu_custom_call.1} parent=51 // pred_fallthru
          _
        // Predicated region
        $region65: #{tpu_custom_call.1} parent=51 // pred_check
          %p1781 = pneg %p221
        $region66: #{tpu_custom_call.1} parent=51 // pred_check_branch
          %1783 = sbr.rel (%p1781) target = $region68
        $region67: #{tpu_custom_call.1} parent=51 // pred_region
          %1784 = dma.done [#allocation5], 16
        $region68: #{tpu_custom_call.1} parent=51 // pred_fallthru
          _
      $region52: #{tpu_custom_call.1} parent=5 // pred_fallthru
        _
      %p1785 = scmp.le.s32.totalorder 2, %s15
      // Predicated region
      $region69: #{tpu_custom_call.1} parent=5 // pred_check
        %p1786 = pneg %p1785
      $region70: #{tpu_custom_call.1} parent=5 // pred_check_branch
        %1788 = sbr.rel (%p1786) target = $region72
      $region71: #{tpu_custom_call.1} parent=5 // pred_region
        %s1789 = ssub.s32 %s15, 2
      $region72: #{tpu_custom_call.1} parent=5 // pred_fallthru
        _
    $region6: #{tpu_custom_call.1} parent=1 // loop_footer
      %s19 = sadd.s32 1, %s15
    $region7: #{tpu_custom_call.1} parent=1 // loop_footer_branch
      %14 = sbr.rel target = $region3
    $region8: #{tpu_custom_call.1} parent=1 // loop_exit
      _
    %1790 = vsyncpa [#allocation5], 1
    %s1791 = scalar_lea.sflag [#allocation5], 1
    %1792 = vsyncpa %s1791, 1

</llo_original>
